<compile_context>
chip_gen: v5e
topology: v5e:2x2
jax: 0.10.0
libtpu: 0.0.40
codegen_flags: <defaults>
</compile_context>

<pallas_src>
import math

import jax
import jax.numpy as jnp
from jax.experimental import pallas as pl
from jax.experimental.pallas import tpu as pltpu

# ----------------------------- configuration -----------------------------
VOCAB = 250
VOCAB_PAD = 256       # padded for MXU / lane alignment (rows >= 250 never hit)
EMB_DIM = 16          # config['embed_dim']
HID_DIM = 32          # config['hid_dim']
OUT_DIM = 2           # task == 'classification' -> 2 logits
NUM_LAYER = 2         # config['num_layer']
MAX_LEN = 8           # max_len
BATCH = 4
BN_EPS = 1e-5
LANE = 128

# ------------- row offsets inside the single packed weight blob ------------
# Every item starts at a multiple-of-8 row and at lane 0 (clean VMEM slices).
R_TABLE = 0                               # (256, H)   emb @ W1 + b1
R_WI = R_TABLE + VOCAB_PAD                # 256        (NL*H rows, 3H cols)
R_WH = R_WI + NUM_LAYER * HID_DIM         # 320
R_W1 = R_WH + NUM_LAYER * HID_DIM         # 384        (L*H, H)
R_W2 = R_W1 + MAX_LEN * HID_DIM           # 640
R_W3 = R_W2 + HID_DIM                     # 672
R_W4 = R_W3 + HID_DIM                     # 704        (H, H/2)
R_W5 = R_W4 + HID_DIM                     # 736        (H/2, 2)
R_BI = R_W5 + HID_DIM // 2                # 752        (NL rows, stride 8)
R_BH = R_BI + NUM_LAYER * 8               # 768
R_BNG = R_BH + NUM_LAYER * 8              # 784        (3 rows, stride 8)
R_BNB = R_BNG + 3 * 8                     # 808
R_B4 = R_BNB + 3 * 8                      # 832
R_B5 = R_B4 + 8                           # 840
TOTAL_ROWS = R_B5 + 8                     # 848


# ----------------------------- Pallas kernel ------------------------------
def _seq_encoder_kernel(tok_ref, mask_ref, w_ref, out_ref):
    """Fused emb+lin1 (one-hot matmul) + 2-layer GRU + proj_head + task head."""
    H, H2g, H3 = HID_DIM, 2 * HID_DIM, 3 * HID_DIM
    HHALF = HID_DIM // 2
    B, L, NL, VP = BATCH, MAX_LEN, NUM_LAYER, VOCAB_PAD
    LB = L * B

    # --- embedding + lin1: one-hot(LB, 256) @ table(256, H) ----------------
    tok = tok_ref[...]                                              # (LB, 1) i32
    vocab_iota = jax.lax.broadcasted_iota(jnp.int32, (LB, VP), 1)
    onehot = (vocab_iota == tok).astype(jnp.float32)                # (LB, VP)
    table = w_ref[R_TABLE:R_TABLE + VP, 0:H]                        # (VP, H)
    seq = jnp.dot(onehot, table, preferred_element_type=jnp.float32)  # (LB, H)

    # --- multi-layer GRU (PyTorch gate order r, z, n), fully unrolled ------
    outs = []
    for l in range(NL):
        wi = w_ref[R_WI + l * H:R_WI + (l + 1) * H, 0:H3]           # (H, 3H)
        wh = w_ref[R_WH + l * H:R_WH + (l + 1) * H, 0:H3]           # (H, 3H)
        bi = w_ref[R_BI + l * 8:R_BI + l * 8 + 1, 0:H3]             # (1, 3H)
        bh = w_ref[R_BH + l * 8:R_BH + l * 8 + 1, 0:H3]             # (1, 3H)
        # hoisted input-gate projections for ALL timesteps of this layer
        x_gates = jnp.dot(seq, wi, preferred_element_type=jnp.float32) + bi
        h = jnp.zeros((B, H), jnp.float32)
        outs = []
        for t in range(L):
            xg = x_gates[t * B:(t + 1) * B, :]                      # (B, 3H)
            hg = jnp.dot(h, wh, preferred_element_type=jnp.float32) + bh
            # fused r/z: one sigmoid over the first 2H lanes
            rz = jax.nn.sigmoid(xg[:, 0:H2g] + hg[:, 0:H2g])
            r = rz[:, 0:H]
            z = rz[:, H:H2g]
            n = jnp.tanh(xg[:, H2g:H3] + r * hg[:, H2g:H3])         # b_hn in r*(.)
            h = (1.0 - z) * n + z * h
            outs.append(h)
        if l < NL - 1:
            seq = jnp.concatenate(outs, axis=0)                     # (LB, H)

    # --- pad_packed mask + flatten + proj_head + output_layers -------------
    # flat[b, t*H + k] = h_t[b, k]; masked once (mask hoisted out of the loop)
    flat = jnp.concatenate(outs, axis=-1) * mask_ref[...]           # (B, L*H)
    w1 = w_ref[R_W1:R_W1 + L * H, 0:H]                              # (L*H, H)
    acc = jnp.dot(flat, w1, preferred_element_type=jnp.float32)     # (B, H)

    def bn_train(x, i, width):
        g = w_ref[R_BNG + 8 * i:R_BNG + 8 * i + 1, 0:width]
        b = w_ref[R_BNB + 8 * i:R_BNB + 8 * i + 1, 0:width]
        m = jnp.mean(x, axis=0, keepdims=True)
        xm = x - m
        v = jnp.mean(xm * xm, axis=0, keepdims=True)                # biased var
        return xm * jax.lax.rsqrt(v + BN_EPS) * g + b

    hy = jnp.maximum(bn_train(acc, 0, H), 0.0)
    hy = jnp.dot(hy, w_ref[R_W2:R_W2 + H, 0:H],
                 preferred_element_type=jnp.float32)
    hy = jnp.maximum(bn_train(hy, 1, H), 0.0)
    hy = jnp.dot(hy, w_ref[R_W3:R_W3 + H, 0:H],
                 preferred_element_type=jnp.float32)
    hy = bn_train(hy, 2, H)
    # output_layers: Linear -> Softplus -> Linear
    hy = jnp.dot(hy, w_ref[R_W4:R_W4 + H, 0:HHALF],
                 preferred_element_type=jnp.float32) + w_ref[R_B4:R_B4 + 1, 0:HHALF]
    hy = jax.nn.softplus(hy)
    out_ref[...] = (jnp.dot(hy, w_ref[R_W5:R_W5 + HHALF, 0:OUT_DIM],
                            preferred_element_type=jnp.float32)
                    + w_ref[R_B5:R_B5 + 1, 0:OUT_DIM])


# ------------------------------- wrapper ----------------------------------
def seq_encoder_forward(w_blob, x_tokens, lengths):
    B, L = x_tokens.shape
    H = HID_DIM
    # time-major flattened tokens: row = t*B + b  (tiny int reshape, glue)
    tok_tm = x_tokens.T.reshape(L * B, 1).astype(jnp.int32)
    # pack_padded_sequence masking: clip lengths to max_len, build (B, L*H)
    # mask host-side so the kernel recurrence contains no masking work.
    lens = jnp.minimum(lengths, MAX_LEN).astype(jnp.int32)
    mask = (jnp.arange(L)[None, :] < lens[:, None]).astype(jnp.float32)  # (B, L)
    mask_flat = jnp.broadcast_to(mask[:, :, None], (B, L, H)).reshape(B, L * H)

    vmem = pl.BlockSpec(memory_space=pltpu.MemorySpace.VMEM)
    out = pl.pallas_call(
        _seq_encoder_kernel,
        out_shape=jax.ShapeDtypeStruct((B, OUT_DIM), jnp.float32),
        in_specs=[vmem, vmem, vmem],
        out_specs=vmem,
    )(tok_tm, mask_flat, w_blob)
    return out


seq_encoder_forward_jit = jax.jit(seq_encoder_forward)


# --------------------------- parameter setup -------------------------------
def init_params(key):
    H, E, L = HID_DIM, EMB_DIM, MAX_LEN
    ks = list(jax.random.split(key, 32))
    nxt = iter(ks).__next__

    def u(shape, scale):
        return jax.random.uniform(nxt(), shape, jnp.float32, -scale, scale)

    s_h = 1.0 / math.sqrt(H)
    s_e = 1.0 / math.sqrt(E)
    p = {
        "emb": jax.random.normal(nxt(), (VOCAB, E), jnp.float32) * 0.1,
        "lin1_w": u((E, H), s_e), "lin1_b": u((1, H), s_e),
    }
    # GRU weights, already transposed to (in, out); PyTorch gate order r, z, n
    for name in ["w_ir", "w_iz", "w_in", "w_hr", "w_hz", "w_hn"]:
        p[name] = u((NUM_LAYER, H, H), s_h)
    for name in ["b_ir", "b_iz", "b_in", "b_hr", "b_hz", "b_hn"]:
        p[name] = u((NUM_LAYER, 1, H), s_h)
    # proj_head: 3x (Linear no-bias + BN); BN gamma=1, beta=0 (default init)
    p["w1"] = u((L * H, H), 1.0 / math.sqrt(L * H))
    p["w2"] = u((H, H), s_h)
    p["w3"] = u((H, H), s_h)
    for i in (1, 2, 3):
        p[f"g{i}"] = jnp.ones((1, H), jnp.float32)
        p[f"be{i}"] = jnp.zeros((1, H), jnp.float32)
    # output_layers
    H2 = H // 2
    p["w4"] = u((H, H2), s_h)
    p["b4"] = u((1, H2), s_h)
    p["w5"] = u((H2, OUT_DIM), 1.0 / math.sqrt(H2))
    p["b5"] = u((1, OUT_DIM), 1.0 / math.sqrt(H2))
    return p


def pack_params(p):
    """One-time host-side packing of ALL weights into one (848,128) blob."""
    H, H3, L, H2 = HID_DIM, 3 * HID_DIM, MAX_LEN, HID_DIM // 2
    blob = jnp.zeros((TOTAL_ROWS, LANE), jnp.float32)

    # fused emb + lin1 lookup table: table[v] = emb[v] @ W1 + b1
    # NOTE: rows 250..255 equal b1 (zero-padded emb rows); tokens are < 250.
    emb_pad = jnp.zeros((VOCAB_PAD, EMB_DIM), jnp.float32).at[:VOCAB].set(p["emb"])
    table = emb_pad @ p["lin1_w"] + p["lin1_b"]                     # (256, H)
    blob = blob.at[R_TABLE:R_TABLE + VOCAB_PAD, :H].set(table)

    W_i = jnp.concatenate([p["w_ir"], p["w_iz"], p["w_in"]], axis=-1)  # (NL,H,3H)
    W_h = jnp.concatenate([p["w_hr"], p["w_hz"], p["w_hn"]], axis=-1)
    b_i = jnp.concatenate([p["b_ir"], p["b_iz"], p["b_in"]], axis=-1)  # (NL,1,3H)
    b_h = jnp.concatenate([p["b_hr"], p["b_hz"], p["b_hn"]], axis=-1)
    for l in range(NUM_LAYER):
        blob = blob.at[R_WI + l * H:R_WI + (l + 1) * H, :H3].set(W_i[l])
        blob = blob.at[R_WH + l * H:R_WH + (l + 1) * H, :H3].set(W_h[l])
        blob = blob.at[R_BI + l * 8, :H3].set(b_i[l, 0])
        blob = blob.at[R_BH + l * 8, :H3].set(b_h[l, 0])

    blob = blob.at[R_W1:R_W1 + L * H, :H].set(p["w1"])
    blob = blob.at[R_W2:R_W2 + H, :H].set(p["w2"])
    blob = blob.at[R_W3:R_W3 + H, :H].set(p["w3"])
    for i in range(3):
        blob = blob.at[R_BNG + 8 * i, :H].set(p[f"g{i + 1}"][0])
        blob = blob.at[R_BNB + 8 * i, :H].set(p[f"be{i + 1}"][0])
    blob = blob.at[R_W4:R_W4 + H, :H2].set(p["w4"])
    blob = blob.at[R_B4, :H2].set(p["b4"][0])
    blob = blob.at[R_W5:R_W5 + H2, :OUT_DIM].set(p["w5"])
    blob = blob.at[R_B5, :OUT_DIM].set(p["b5"][0])
    return blob


# ---------------------------- pure-JAX reference ---------------------------
def reference_forward(params, x_tokens, lengths):
    B, L = x_tokens.shape
    emb_x = jnp.take(params["emb"], x_tokens, axis=0).astype(jnp.float32)
    seq = emb_x @ params["lin1_w"] + params["lin1_b"]
    for l in range(NUM_LAYER):
        h = jnp.zeros((B, HID_DIM), jnp.float32)
        outs = []
        for t in range(L):
            x_t = seq[:, t, :]
            r = jax.nn.sigmoid(x_t @ params["w_ir"][l] + params["b_ir"][l]
                               + h @ params["w_hr"][l] + params["b_hr"][l])
            z = jax.nn.sigmoid(x_t @ params["w_iz"][l] + params["b_iz"][l]
                               + h @ params["w_hz"][l] + params["b_hz"][l])
            n = jnp.tanh(x_t @ params["w_in"][l] + params["b_in"][l]
                         + r * (h @ params["w_hn"][l] + params["b_hn"][l]))
            h = (1.0 - z) * n + z * h
            outs.append(h)
        seq = jnp.stack(outs, axis=1)
    lens = jnp.minimum(lengths, MAX_LEN).astype(jnp.int32)
    mask = (jnp.arange(L)[None, :] < lens[:, None]).astype(jnp.float32)
    seq = seq * mask[:, :, None]
    flat = seq.reshape(B, L * HID_DIM)

    def bn(x, g, b):
        m = x.mean(0, keepdims=True)
        v = ((x - m) ** 2).mean(0, keepdims=True)
        return (x - m) / jnp.sqrt(v + BN_EPS) * g + b

    h = jnp.maximum(bn(flat @ params["w1"], params["g1"], params["be1"]), 0.0)
    h = jnp.maximum(bn(h @ params["w2"], params["g2"], params["be2"]), 0.0)
    h = bn(h @ params["w3"], params["g3"], params["be3"])
    h = jax.nn.softplus(h @ params["w4"] + params["b4"])
    return h @ params["w5"] + params["b5"]


# --------------------------------- main ------------------------------------
if __name__ == "__main__":
    key = jax.random.PRNGKey(0)
    k_tok, k_par = jax.random.split(key)
    x_tokens = jax.random.randint(k_tok, (BATCH, MAX_LEN), 0, VOCAB, dtype=jnp.int32)
    lengths = jnp.array([8, 5, 3, 10], dtype=jnp.int32)   # one > max_len -> clipped
    params = init_params(k_par)
    w_blob = pack_params(params)                           # one-time packing

    out = seq_encoder_forward_jit(w_blob, x_tokens, lengths)
    out = jax.block_until_ready(out)

    ref = reference_forward(params, x_tokens, lengths)
    assert out.shape == (BATCH, OUT_DIM), out.shape
    assert jnp.allclose(out, ref, atol=5e-3, rtol=5e-3), (out, ref)
    print("KERNEL_OK")
</pallas_src>

<mosaic_0001>
module attributes {stable_mosaic.version = 11 : i64} {
  func.func @_seq_encoder_kernel(%arg0: memref<32x1xi32, #tpu.memory_space<vmem>>, %arg1: memref<4x256xf32, #tpu.memory_space<vmem>>, %arg2: memref<848x128xf32, #tpu.memory_space<vmem>>, %arg3: memref<4x2xf32, #tpu.memory_space<vmem>>) attributes {dimension_semantics = [], scalar_prefetch = 0 : i64, scratch_operands = 0 : i64, tpu.core_type = #tpu.core_type<tc>} {
    %c0 = arith.constant 0 : index
    %c0_0 = arith.constant 0 : index
    %0 = vector.load %arg0[%c0, %c0_0] : memref<32x1xi32, #tpu.memory_space<vmem>>, vector<32x1xi32>
    %1 = tpu.iota {dimensions = array<i32: 1>} : vector<32x256xi32>
    %2 = vector.broadcast %0 : vector<32x1xi32> to vector<32x256xi32>
    %3 = arith.cmpi eq, %1, %2 : vector<32x256xi32>
    %4 = arith.extui %3 : vector<32x256xi1> to vector<32x256xi32>
    %5 = arith.sitofp %4 : vector<32x256xi32> to vector<32x256xf32>
    %c0_1 = arith.constant 0 : index
    %c0_2 = arith.constant 0 : index
    %6 = vector.load %arg2[%c0_1, %c0_2] : memref<848x128xf32, #tpu.memory_space<vmem>>, vector<256x32xf32>
    %cst = arith.constant dense<0.000000e+00> : vector<32x32xf32>
    %7 = tpu.matmul %5, %6, %cst {dimension_numbers = #tpu.dot_dimension_numbers<[1], [0], [0], [1], [0, 0, 1, 1], [], []>} : vector<32x256xf32>, vector<256x32xf32>, vector<32x32xf32> -> vector<32x32xf32>
    %c256 = arith.constant 256 : index
    %c0_3 = arith.constant 0 : index
    %8 = vector.load %arg2[%c256, %c0_3] : memref<848x128xf32, #tpu.memory_space<vmem>>, vector<32x96xf32>
    %c320 = arith.constant 320 : index
    %c0_4 = arith.constant 0 : index
    %9 = vector.load %arg2[%c320, %c0_4] : memref<848x128xf32, #tpu.memory_space<vmem>>, vector<32x96xf32>
    %c752 = arith.constant 752 : index
    %c0_5 = arith.constant 0 : index
    %10 = vector.load %arg2[%c752, %c0_5] : memref<848x128xf32, #tpu.memory_space<vmem>>, vector<1x96xf32>
    %c768 = arith.constant 768 : index
    %c0_6 = arith.constant 0 : index
    %11 = vector.load %arg2[%c768, %c0_6] : memref<848x128xf32, #tpu.memory_space<vmem>>, vector<1x96xf32>
    %cst_7 = arith.constant dense<0.000000e+00> : vector<32x96xf32>
    %12 = tpu.matmul %7, %8, %cst_7 {dimension_numbers = #tpu.dot_dimension_numbers<[1], [0], [0], [1], [0, 0, 1, 1], [], []>} : vector<32x32xf32>, vector<32x96xf32>, vector<32x96xf32> -> vector<32x96xf32>
    %13 = vector.broadcast %10 : vector<1x96xf32> to vector<32x96xf32>
    %14 = arith.addf %12, %13 : vector<32x96xf32>
    %cst_8 = arith.constant 0.000000e+00 : f32
    %15 = vector.broadcast %cst_8 : f32 to vector<4x32xf32>
    %16 = vector.extract_strided_slice %14 {offsets = [0, 0], sizes = [4, 96], strides = [1, 1]} : vector<32x96xf32> to vector<4x96xf32>
    %cst_9 = arith.constant dense<0.000000e+00> : vector<4x96xf32>
    %17 = tpu.matmul %15, %9, %cst_9 {dimension_numbers = #tpu.dot_dimension_numbers<[1], [0], [0], [1], [0, 0, 1, 1], [], []>} : vector<4x32xf32>, vector<32x96xf32>, vector<4x96xf32> -> vector<4x96xf32>
    %18 = vector.broadcast %11 : vector<1x96xf32> to vector<4x96xf32>
    %19 = arith.addf %17, %18 : vector<4x96xf32>
    %20 = vector.extract_strided_slice %16 {offsets = [0, 0], sizes = [4, 64], strides = [1, 1]} : vector<4x96xf32> to vector<4x64xf32>
    %21 = vector.extract_strided_slice %19 {offsets = [0, 0], sizes = [4, 64], strides = [1, 1]} : vector<4x96xf32> to vector<4x64xf32>
    %22 = arith.addf %20, %21 : vector<4x64xf32>
    %23 = arith.negf %22 : vector<4x64xf32>
    %24 = math.exp %23 : vector<4x64xf32>
    %cst_10 = arith.constant 1.000000e+00 : f32
    %25 = vector.broadcast %cst_10 : f32 to vector<4x64xf32>
    %26 = arith.addf %25, %24 : vector<4x64xf32>
    %27 = arith.divf %25, %26 : vector<4x64xf32>
    %28 = vector.extract_strided_slice %27 {offsets = [0, 0], sizes = [4, 32], strides = [1, 1]} : vector<4x64xf32> to vector<4x32xf32>
    %29 = vector.extract_strided_slice %27 {offsets = [0, 32], sizes = [4, 32], strides = [1, 1]} : vector<4x64xf32> to vector<4x32xf32>
    %30 = vector.extract_strided_slice %16 {offsets = [0, 64], sizes = [4, 32], strides = [1, 1]} : vector<4x96xf32> to vector<4x32xf32>
    %31 = vector.extract_strided_slice %19 {offsets = [0, 64], sizes = [4, 32], strides = [1, 1]} : vector<4x96xf32> to vector<4x32xf32>
    %32 = arith.mulf %28, %31 : vector<4x32xf32>
    %33 = arith.addf %30, %32 : vector<4x32xf32>
    %34 = math.tanh %33 : vector<4x32xf32>
    %cst_11 = arith.constant 1.000000e+00 : f32
    %35 = vector.broadcast %cst_11 : f32 to vector<4x32xf32>
    %36 = arith.subf %35, %29 : vector<4x32xf32>
    %37 = arith.mulf %36, %34 : vector<4x32xf32>
    %38 = arith.mulf %29, %15 : vector<4x32xf32>
    %39 = arith.addf %37, %38 : vector<4x32xf32>
    %40 = vector.extract_strided_slice %14 {offsets = [4, 0], sizes = [4, 96], strides = [1, 1]} : vector<32x96xf32> to vector<4x96xf32>
    %cst_12 = arith.constant dense<0.000000e+00> : vector<4x96xf32>
    %41 = tpu.matmul %39, %9, %cst_12 {dimension_numbers = #tpu.dot_dimension_numbers<[1], [0], [0], [1], [0, 0, 1, 1], [], []>} : vector<4x32xf32>, vector<32x96xf32>, vector<4x96xf32> -> vector<4x96xf32>
    %42 = vector.broadcast %11 : vector<1x96xf32> to vector<4x96xf32>
    %43 = arith.addf %41, %42 : vector<4x96xf32>
    %44 = vector.extract_strided_slice %40 {offsets = [0, 0], sizes = [4, 64], strides = [1, 1]} : vector<4x96xf32> to vector<4x64xf32>
    %45 = vector.extract_strided_slice %43 {offsets = [0, 0], sizes = [4, 64], strides = [1, 1]} : vector<4x96xf32> to vector<4x64xf32>
    %46 = arith.addf %44, %45 : vector<4x64xf32>
    %47 = arith.negf %46 : vector<4x64xf32>
    %48 = math.exp %47 : vector<4x64xf32>
    %cst_13 = arith.constant 1.000000e+00 : f32
    %49 = vector.broadcast %cst_13 : f32 to vector<4x64xf32>
    %50 = arith.addf %49, %48 : vector<4x64xf32>
    %51 = arith.divf %49, %50 : vector<4x64xf32>
    %52 = vector.extract_strided_slice %51 {offsets = [0, 0], sizes = [4, 32], strides = [1, 1]} : vector<4x64xf32> to vector<4x32xf32>
    %53 = vector.extract_strided_slice %51 {offsets = [0, 32], sizes = [4, 32], strides = [1, 1]} : vector<4x64xf32> to vector<4x32xf32>
    %54 = vector.extract_strided_slice %40 {offsets = [0, 64], sizes = [4, 32], strides = [1, 1]} : vector<4x96xf32> to vector<4x32xf32>
    %55 = vector.extract_strided_slice %43 {offsets = [0, 64], sizes = [4, 32], strides = [1, 1]} : vector<4x96xf32> to vector<4x32xf32>
    %56 = arith.mulf %52, %55 : vector<4x32xf32>
    %57 = arith.addf %54, %56 : vector<4x32xf32>
    %58 = math.tanh %57 : vector<4x32xf32>
    %cst_14 = arith.constant 1.000000e+00 : f32
    %59 = vector.broadcast %cst_14 : f32 to vector<4x32xf32>
    %60 = arith.subf %59, %53 : vector<4x32xf32>
    %61 = arith.mulf %60, %58 : vector<4x32xf32>
    %62 = arith.mulf %53, %39 : vector<4x32xf32>
    %63 = arith.addf %61, %62 : vector<4x32xf32>
    %64 = vector.extract_strided_slice %14 {offsets = [8, 0], sizes = [4, 96], strides = [1, 1]} : vector<32x96xf32> to vector<4x96xf32>
    %cst_15 = arith.constant dense<0.000000e+00> : vector<4x96xf32>
    %65 = tpu.matmul %63, %9, %cst_15 {dimension_numbers = #tpu.dot_dimension_numbers<[1], [0], [0], [1], [0, 0, 1, 1], [], []>} : vector<4x32xf32>, vector<32x96xf32>, vector<4x96xf32> -> vector<4x96xf32>
    %66 = vector.broadcast %11 : vector<1x96xf32> to vector<4x96xf32>
    %67 = arith.addf %65, %66 : vector<4x96xf32>
    %68 = vector.extract_strided_slice %64 {offsets = [0, 0], sizes = [4, 64], strides = [1, 1]} : vector<4x96xf32> to vector<4x64xf32>
    %69 = vector.extract_strided_slice %67 {offsets = [0, 0], sizes = [4, 64], strides = [1, 1]} : vector<4x96xf32> to vector<4x64xf32>
    %70 = arith.addf %68, %69 : vector<4x64xf32>
    %71 = arith.negf %70 : vector<4x64xf32>
    %72 = math.exp %71 : vector<4x64xf32>
    %cst_16 = arith.constant 1.000000e+00 : f32
    %73 = vector.broadcast %cst_16 : f32 to vector<4x64xf32>
    %74 = arith.addf %73, %72 : vector<4x64xf32>
    %75 = arith.divf %73, %74 : vector<4x64xf32>
    %76 = vector.extract_strided_slice %75 {offsets = [0, 0], sizes = [4, 32], strides = [1, 1]} : vector<4x64xf32> to vector<4x32xf32>
    %77 = vector.extract_strided_slice %75 {offsets = [0, 32], sizes = [4, 32], strides = [1, 1]} : vector<4x64xf32> to vector<4x32xf32>
    %78 = vector.extract_strided_slice %64 {offsets = [0, 64], sizes = [4, 32], strides = [1, 1]} : vector<4x96xf32> to vector<4x32xf32>
    %79 = vector.extract_strided_slice %67 {offsets = [0, 64], sizes = [4, 32], strides = [1, 1]} : vector<4x96xf32> to vector<4x32xf32>
    %80 = arith.mulf %76, %79 : vector<4x32xf32>
    %81 = arith.addf %78, %80 : vector<4x32xf32>
    %82 = math.tanh %81 : vector<4x32xf32>
    %cst_17 = arith.constant 1.000000e+00 : f32
    %83 = vector.broadcast %cst_17 : f32 to vector<4x32xf32>
    %84 = arith.subf %83, %77 : vector<4x32xf32>
    %85 = arith.mulf %84, %82 : vector<4x32xf32>
    %86 = arith.mulf %77, %63 : vector<4x32xf32>
    %87 = arith.addf %85, %86 : vector<4x32xf32>
    %88 = vector.extract_strided_slice %14 {offsets = [12, 0], sizes = [4, 96], strides = [1, 1]} : vector<32x96xf32> to vector<4x96xf32>
    %cst_18 = arith.constant dense<0.000000e+00> : vector<4x96xf32>
    %89 = tpu.matmul %87, %9, %cst_18 {dimension_numbers = #tpu.dot_dimension_numbers<[1], [0], [0], [1], [0, 0, 1, 1], [], []>} : vector<4x32xf32>, vector<32x96xf32>, vector<4x96xf32> -> vector<4x96xf32>
    %90 = vector.broadcast %11 : vector<1x96xf32> to vector<4x96xf32>
    %91 = arith.addf %89, %90 : vector<4x96xf32>
    %92 = vector.extract_strided_slice %88 {offsets = [0, 0], sizes = [4, 64], strides = [1, 1]} : vector<4x96xf32> to vector<4x64xf32>
    %93 = vector.extract_strided_slice %91 {offsets = [0, 0], sizes = [4, 64], strides = [1, 1]} : vector<4x96xf32> to vector<4x64xf32>
    %94 = arith.addf %92, %93 : vector<4x64xf32>
    %95 = arith.negf %94 : vector<4x64xf32>
    %96 = math.exp %95 : vector<4x64xf32>
    %cst_19 = arith.constant 1.000000e+00 : f32
    %97 = vector.broadcast %cst_19 : f32 to vector<4x64xf32>
    %98 = arith.addf %97, %96 : vector<4x64xf32>
    %99 = arith.divf %97, %98 : vector<4x64xf32>
    %100 = vector.extract_strided_slice %99 {offsets = [0, 0], sizes = [4, 32], strides = [1, 1]} : vector<4x64xf32> to vector<4x32xf32>
    %101 = vector.extract_strided_slice %99 {offsets = [0, 32], sizes = [4, 32], strides = [1, 1]} : vector<4x64xf32> to vector<4x32xf32>
    %102 = vector.extract_strided_slice %88 {offsets = [0, 64], sizes = [4, 32], strides = [1, 1]} : vector<4x96xf32> to vector<4x32xf32>
    %103 = vector.extract_strided_slice %91 {offsets = [0, 64], sizes = [4, 32], strides = [1, 1]} : vector<4x96xf32> to vector<4x32xf32>
    %104 = arith.mulf %100, %103 : vector<4x32xf32>
    %105 = arith.addf %102, %104 : vector<4x32xf32>
    %106 = math.tanh %105 : vector<4x32xf32>
    %cst_20 = arith.constant 1.000000e+00 : f32
    %107 = vector.broadcast %cst_20 : f32 to vector<4x32xf32>
    %108 = arith.subf %107, %101 : vector<4x32xf32>
    %109 = arith.mulf %108, %106 : vector<4x32xf32>
    %110 = arith.mulf %101, %87 : vector<4x32xf32>
    %111 = arith.addf %109, %110 : vector<4x32xf32>
    %112 = vector.extract_strided_slice %14 {offsets = [16, 0], sizes = [4, 96], strides = [1, 1]} : vector<32x96xf32> to vector<4x96xf32>
    %cst_21 = arith.constant dense<0.000000e+00> : vector<4x96xf32>
    %113 = tpu.matmul %111, %9, %cst_21 {dimension_numbers = #tpu.dot_dimension_numbers<[1], [0], [0], [1], [0, 0, 1, 1], [], []>} : vector<4x32xf32>, vector<32x96xf32>, vector<4x96xf32> -> vector<4x96xf32>
    %114 = vector.broadcast %11 : vector<1x96xf32> to vector<4x96xf32>
    %115 = arith.addf %113, %114 : vector<4x96xf32>
    %116 = vector.extract_strided_slice %112 {offsets = [0, 0], sizes = [4, 64], strides = [1, 1]} : vector<4x96xf32> to vector<4x64xf32>
    %117 = vector.extract_strided_slice %115 {offsets = [0, 0], sizes = [4, 64], strides = [1, 1]} : vector<4x96xf32> to vector<4x64xf32>
    %118 = arith.addf %116, %117 : vector<4x64xf32>
    %119 = arith.negf %118 : vector<4x64xf32>
    %120 = math.exp %119 : vector<4x64xf32>
    %cst_22 = arith.constant 1.000000e+00 : f32
    %121 = vector.broadcast %cst_22 : f32 to vector<4x64xf32>
    %122 = arith.addf %121, %120 : vector<4x64xf32>
    %123 = arith.divf %121, %122 : vector<4x64xf32>
    %124 = vector.extract_strided_slice %123 {offsets = [0, 0], sizes = [4, 32], strides = [1, 1]} : vector<4x64xf32> to vector<4x32xf32>
    %125 = vector.extract_strided_slice %123 {offsets = [0, 32], sizes = [4, 32], strides = [1, 1]} : vector<4x64xf32> to vector<4x32xf32>
    %126 = vector.extract_strided_slice %112 {offsets = [0, 64], sizes = [4, 32], strides = [1, 1]} : vector<4x96xf32> to vector<4x32xf32>
    %127 = vector.extract_strided_slice %115 {offsets = [0, 64], sizes = [4, 32], strides = [1, 1]} : vector<4x96xf32> to vector<4x32xf32>
    %128 = arith.mulf %124, %127 : vector<4x32xf32>
    %129 = arith.addf %126, %128 : vector<4x32xf32>
    %130 = math.tanh %129 : vector<4x32xf32>
    %cst_23 = arith.constant 1.000000e+00 : f32
    %131 = vector.broadcast %cst_23 : f32 to vector<4x32xf32>
    %132 = arith.subf %131, %125 : vector<4x32xf32>
    %133 = arith.mulf %132, %130 : vector<4x32xf32>
    %134 = arith.mulf %125, %111 : vector<4x32xf32>
    %135 = arith.addf %133, %134 : vector<4x32xf32>
    %136 = vector.extract_strided_slice %14 {offsets = [20, 0], sizes = [4, 96], strides = [1, 1]} : vector<32x96xf32> to vector<4x96xf32>
    %cst_24 = arith.constant dense<0.000000e+00> : vector<4x96xf32>
    %137 = tpu.matmul %135, %9, %cst_24 {dimension_numbers = #tpu.dot_dimension_numbers<[1], [0], [0], [1], [0, 0, 1, 1], [], []>} : vector<4x32xf32>, vector<32x96xf32>, vector<4x96xf32> -> vector<4x96xf32>
    %138 = vector.broadcast %11 : vector<1x96xf32> to vector<4x96xf32>
    %139 = arith.addf %137, %138 : vector<4x96xf32>
    %140 = vector.extract_strided_slice %136 {offsets = [0, 0], sizes = [4, 64], strides = [1, 1]} : vector<4x96xf32> to vector<4x64xf32>
    %141 = vector.extract_strided_slice %139 {offsets = [0, 0], sizes = [4, 64], strides = [1, 1]} : vector<4x96xf32> to vector<4x64xf32>
    %142 = arith.addf %140, %141 : vector<4x64xf32>
    %143 = arith.negf %142 : vector<4x64xf32>
    %144 = math.exp %143 : vector<4x64xf32>
    %cst_25 = arith.constant 1.000000e+00 : f32
    %145 = vector.broadcast %cst_25 : f32 to vector<4x64xf32>
    %146 = arith.addf %145, %144 : vector<4x64xf32>
    %147 = arith.divf %145, %146 : vector<4x64xf32>
    %148 = vector.extract_strided_slice %147 {offsets = [0, 0], sizes = [4, 32], strides = [1, 1]} : vector<4x64xf32> to vector<4x32xf32>
    %149 = vector.extract_strided_slice %147 {offsets = [0, 32], sizes = [4, 32], strides = [1, 1]} : vector<4x64xf32> to vector<4x32xf32>
    %150 = vector.extract_strided_slice %136 {offsets = [0, 64], sizes = [4, 32], strides = [1, 1]} : vector<4x96xf32> to vector<4x32xf32>
    %151 = vector.extract_strided_slice %139 {offsets = [0, 64], sizes = [4, 32], strides = [1, 1]} : vector<4x96xf32> to vector<4x32xf32>
    %152 = arith.mulf %148, %151 : vector<4x32xf32>
    %153 = arith.addf %150, %152 : vector<4x32xf32>
    %154 = math.tanh %153 : vector<4x32xf32>
    %cst_26 = arith.constant 1.000000e+00 : f32
    %155 = vector.broadcast %cst_26 : f32 to vector<4x32xf32>
    %156 = arith.subf %155, %149 : vector<4x32xf32>
    %157 = arith.mulf %156, %154 : vector<4x32xf32>
    %158 = arith.mulf %149, %135 : vector<4x32xf32>
    %159 = arith.addf %157, %158 : vector<4x32xf32>
    %160 = vector.extract_strided_slice %14 {offsets = [24, 0], sizes = [4, 96], strides = [1, 1]} : vector<32x96xf32> to vector<4x96xf32>
    %cst_27 = arith.constant dense<0.000000e+00> : vector<4x96xf32>
    %161 = tpu.matmul %159, %9, %cst_27 {dimension_numbers = #tpu.dot_dimension_numbers<[1], [0], [0], [1], [0, 0, 1, 1], [], []>} : vector<4x32xf32>, vector<32x96xf32>, vector<4x96xf32> -> vector<4x96xf32>
    %162 = vector.broadcast %11 : vector<1x96xf32> to vector<4x96xf32>
    %163 = arith.addf %161, %162 : vector<4x96xf32>
    %164 = vector.extract_strided_slice %160 {offsets = [0, 0], sizes = [4, 64], strides = [1, 1]} : vector<4x96xf32> to vector<4x64xf32>
    %165 = vector.extract_strided_slice %163 {offsets = [0, 0], sizes = [4, 64], strides = [1, 1]} : vector<4x96xf32> to vector<4x64xf32>
    %166 = arith.addf %164, %165 : vector<4x64xf32>
    %167 = arith.negf %166 : vector<4x64xf32>
    %168 = math.exp %167 : vector<4x64xf32>
    %cst_28 = arith.constant 1.000000e+00 : f32
    %169 = vector.broadcast %cst_28 : f32 to vector<4x64xf32>
    %170 = arith.addf %169, %168 : vector<4x64xf32>
    %171 = arith.divf %169, %170 : vector<4x64xf32>
    %172 = vector.extract_strided_slice %171 {offsets = [0, 0], sizes = [4, 32], strides = [1, 1]} : vector<4x64xf32> to vector<4x32xf32>
    %173 = vector.extract_strided_slice %171 {offsets = [0, 32], sizes = [4, 32], strides = [1, 1]} : vector<4x64xf32> to vector<4x32xf32>
    %174 = vector.extract_strided_slice %160 {offsets = [0, 64], sizes = [4, 32], strides = [1, 1]} : vector<4x96xf32> to vector<4x32xf32>
    %175 = vector.extract_strided_slice %163 {offsets = [0, 64], sizes = [4, 32], strides = [1, 1]} : vector<4x96xf32> to vector<4x32xf32>
    %176 = arith.mulf %172, %175 : vector<4x32xf32>
    %177 = arith.addf %174, %176 : vector<4x32xf32>
    %178 = math.tanh %177 : vector<4x32xf32>
    %cst_29 = arith.constant 1.000000e+00 : f32
    %179 = vector.broadcast %cst_29 : f32 to vector<4x32xf32>
    %180 = arith.subf %179, %173 : vector<4x32xf32>
    %181 = arith.mulf %180, %178 : vector<4x32xf32>
    %182 = arith.mulf %173, %159 : vector<4x32xf32>
    %183 = arith.addf %181, %182 : vector<4x32xf32>
    %184 = vector.extract_strided_slice %14 {offsets = [28, 0], sizes = [4, 96], strides = [1, 1]} : vector<32x96xf32> to vector<4x96xf32>
    %cst_30 = arith.constant dense<0.000000e+00> : vector<4x96xf32>
    %185 = tpu.matmul %183, %9, %cst_30 {dimension_numbers = #tpu.dot_dimension_numbers<[1], [0], [0], [1], [0, 0, 1, 1], [], []>} : vector<4x32xf32>, vector<32x96xf32>, vector<4x96xf32> -> vector<4x96xf32>
    %186 = vector.broadcast %11 : vector<1x96xf32> to vector<4x96xf32>
    %187 = arith.addf %185, %186 : vector<4x96xf32>
    %188 = vector.extract_strided_slice %184 {offsets = [0, 0], sizes = [4, 64], strides = [1, 1]} : vector<4x96xf32> to vector<4x64xf32>
    %189 = vector.extract_strided_slice %187 {offsets = [0, 0], sizes = [4, 64], strides = [1, 1]} : vector<4x96xf32> to vector<4x64xf32>
    %190 = arith.addf %188, %189 : vector<4x64xf32>
    %191 = arith.negf %190 : vector<4x64xf32>
    %192 = math.exp %191 : vector<4x64xf32>
    %cst_31 = arith.constant 1.000000e+00 : f32
    %193 = vector.broadcast %cst_31 : f32 to vector<4x64xf32>
    %194 = arith.addf %193, %192 : vector<4x64xf32>
    %195 = arith.divf %193, %194 : vector<4x64xf32>
    %196 = vector.extract_strided_slice %195 {offsets = [0, 0], sizes = [4, 32], strides = [1, 1]} : vector<4x64xf32> to vector<4x32xf32>
    %197 = vector.extract_strided_slice %195 {offsets = [0, 32], sizes = [4, 32], strides = [1, 1]} : vector<4x64xf32> to vector<4x32xf32>
    %198 = vector.extract_strided_slice %184 {offsets = [0, 64], sizes = [4, 32], strides = [1, 1]} : vector<4x96xf32> to vector<4x32xf32>
    %199 = vector.extract_strided_slice %187 {offsets = [0, 64], sizes = [4, 32], strides = [1, 1]} : vector<4x96xf32> to vector<4x32xf32>
    %200 = arith.mulf %196, %199 : vector<4x32xf32>
    %201 = arith.addf %198, %200 : vector<4x32xf32>
    %202 = math.tanh %201 : vector<4x32xf32>
    %cst_32 = arith.constant 1.000000e+00 : f32
    %203 = vector.broadcast %cst_32 : f32 to vector<4x32xf32>
    %204 = arith.subf %203, %197 : vector<4x32xf32>
    %205 = arith.mulf %204, %202 : vector<4x32xf32>
    %206 = arith.mulf %197, %183 : vector<4x32xf32>
    %207 = arith.addf %205, %206 : vector<4x32xf32>
    %208 = tpu.concatenate %39, %63, %87, %111, %135, %159, %183, %207 in 0 : vector<4x32xf32>, vector<4x32xf32>, vector<4x32xf32>, vector<4x32xf32>, vector<4x32xf32>, vector<4x32xf32>, vector<4x32xf32>, vector<4x32xf32> -> vector<32x32xf32>
    %c288 = arith.constant 288 : index
    %c0_33 = arith.constant 0 : index
    %209 = vector.load %arg2[%c288, %c0_33] : memref<848x128xf32, #tpu.memory_space<vmem>>, vector<32x96xf32>
    %c352 = arith.constant 352 : index
    %c0_34 = arith.constant 0 : index
    %210 = vector.load %arg2[%c352, %c0_34] : memref<848x128xf32, #tpu.memory_space<vmem>>, vector<32x96xf32>
    %c760 = arith.constant 760 : index
    %c0_35 = arith.constant 0 : index
    %211 = vector.load %arg2[%c760, %c0_35] : memref<848x128xf32, #tpu.memory_space<vmem>>, vector<1x96xf32>
    %c776 = arith.constant 776 : index
    %c0_36 = arith.constant 0 : index
    %212 = vector.load %arg2[%c776, %c0_36] : memref<848x128xf32, #tpu.memory_space<vmem>>, vector<1x96xf32>
    %cst_37 = arith.constant dense<0.000000e+00> : vector<32x96xf32>
    %213 = tpu.matmul %208, %209, %cst_37 {dimension_numbers = #tpu.dot_dimension_numbers<[1], [0], [0], [1], [0, 0, 1, 1], [], []>} : vector<32x32xf32>, vector<32x96xf32>, vector<32x96xf32> -> vector<32x96xf32>
    %214 = vector.broadcast %211 : vector<1x96xf32> to vector<32x96xf32>
    %215 = arith.addf %213, %214 : vector<32x96xf32>
    %cst_38 = arith.constant 0.000000e+00 : f32
    %216 = vector.broadcast %cst_38 : f32 to vector<4x32xf32>
    %217 = vector.extract_strided_slice %215 {offsets = [0, 0], sizes = [4, 96], strides = [1, 1]} : vector<32x96xf32> to vector<4x96xf32>
    %cst_39 = arith.constant dense<0.000000e+00> : vector<4x96xf32>
    %218 = tpu.matmul %216, %210, %cst_39 {dimension_numbers = #tpu.dot_dimension_numbers<[1], [0], [0], [1], [0, 0, 1, 1], [], []>} : vector<4x32xf32>, vector<32x96xf32>, vector<4x96xf32> -> vector<4x96xf32>
    %219 = vector.broadcast %212 : vector<1x96xf32> to vector<4x96xf32>
    %220 = arith.addf %218, %219 : vector<4x96xf32>
    %221 = vector.extract_strided_slice %217 {offsets = [0, 0], sizes = [4, 64], strides = [1, 1]} : vector<4x96xf32> to vector<4x64xf32>
    %222 = vector.extract_strided_slice %220 {offsets = [0, 0], sizes = [4, 64], strides = [1, 1]} : vector<4x96xf32> to vector<4x64xf32>
    %223 = arith.addf %221, %222 : vector<4x64xf32>
    %224 = arith.negf %223 : vector<4x64xf32>
    %225 = math.exp %224 : vector<4x64xf32>
    %cst_40 = arith.constant 1.000000e+00 : f32
    %226 = vector.broadcast %cst_40 : f32 to vector<4x64xf32>
    %227 = arith.addf %226, %225 : vector<4x64xf32>
    %228 = arith.divf %226, %227 : vector<4x64xf32>
    %229 = vector.extract_strided_slice %228 {offsets = [0, 0], sizes = [4, 32], strides = [1, 1]} : vector<4x64xf32> to vector<4x32xf32>
    %230 = vector.extract_strided_slice %228 {offsets = [0, 32], sizes = [4, 32], strides = [1, 1]} : vector<4x64xf32> to vector<4x32xf32>
    %231 = vector.extract_strided_slice %217 {offsets = [0, 64], sizes = [4, 32], strides = [1, 1]} : vector<4x96xf32> to vector<4x32xf32>
    %232 = vector.extract_strided_slice %220 {offsets = [0, 64], sizes = [4, 32], strides = [1, 1]} : vector<4x96xf32> to vector<4x32xf32>
    %233 = arith.mulf %229, %232 : vector<4x32xf32>
    %234 = arith.addf %231, %233 : vector<4x32xf32>
    %235 = math.tanh %234 : vector<4x32xf32>
    %cst_41 = arith.constant 1.000000e+00 : f32
    %236 = vector.broadcast %cst_41 : f32 to vector<4x32xf32>
    %237 = arith.subf %236, %230 : vector<4x32xf32>
    %238 = arith.mulf %237, %235 : vector<4x32xf32>
    %239 = arith.mulf %230, %216 : vector<4x32xf32>
    %240 = arith.addf %238, %239 : vector<4x32xf32>
    %241 = vector.extract_strided_slice %215 {offsets = [4, 0], sizes = [4, 96], strides = [1, 1]} : vector<32x96xf32> to vector<4x96xf32>
    %cst_42 = arith.constant dense<0.000000e+00> : vector<4x96xf32>
    %242 = tpu.matmul %240, %210, %cst_42 {dimension_numbers = #tpu.dot_dimension_numbers<[1], [0], [0], [1], [0, 0, 1, 1], [], []>} : vector<4x32xf32>, vector<32x96xf32>, vector<4x96xf32> -> vector<4x96xf32>
    %243 = vector.broadcast %212 : vector<1x96xf32> to vector<4x96xf32>
    %244 = arith.addf %242, %243 : vector<4x96xf32>
    %245 = vector.extract_strided_slice %241 {offsets = [0, 0], sizes = [4, 64], strides = [1, 1]} : vector<4x96xf32> to vector<4x64xf32>
    %246 = vector.extract_strided_slice %244 {offsets = [0, 0], sizes = [4, 64], strides = [1, 1]} : vector<4x96xf32> to vector<4x64xf32>
    %247 = arith.addf %245, %246 : vector<4x64xf32>
    %248 = arith.negf %247 : vector<4x64xf32>
    %249 = math.exp %248 : vector<4x64xf32>
    %cst_43 = arith.constant 1.000000e+00 : f32
    %250 = vector.broadcast %cst_43 : f32 to vector<4x64xf32>
    %251 = arith.addf %250, %249 : vector<4x64xf32>
    %252 = arith.divf %250, %251 : vector<4x64xf32>
    %253 = vector.extract_strided_slice %252 {offsets = [0, 0], sizes = [4, 32], strides = [1, 1]} : vector<4x64xf32> to vector<4x32xf32>
    %254 = vector.extract_strided_slice %252 {offsets = [0, 32], sizes = [4, 32], strides = [1, 1]} : vector<4x64xf32> to vector<4x32xf32>
    %255 = vector.extract_strided_slice %241 {offsets = [0, 64], sizes = [4, 32], strides = [1, 1]} : vector<4x96xf32> to vector<4x32xf32>
    %256 = vector.extract_strided_slice %244 {offsets = [0, 64], sizes = [4, 32], strides = [1, 1]} : vector<4x96xf32> to vector<4x32xf32>
    %257 = arith.mulf %253, %256 : vector<4x32xf32>
    %258 = arith.addf %255, %257 : vector<4x32xf32>
    %259 = math.tanh %258 : vector<4x32xf32>
    %cst_44 = arith.constant 1.000000e+00 : f32
    %260 = vector.broadcast %cst_44 : f32 to vector<4x32xf32>
    %261 = arith.subf %260, %254 : vector<4x32xf32>
    %262 = arith.mulf %261, %259 : vector<4x32xf32>
    %263 = arith.mulf %254, %240 : vector<4x32xf32>
    %264 = arith.addf %262, %263 : vector<4x32xf32>
    %265 = vector.extract_strided_slice %215 {offsets = [8, 0], sizes = [4, 96], strides = [1, 1]} : vector<32x96xf32> to vector<4x96xf32>
    %cst_45 = arith.constant dense<0.000000e+00> : vector<4x96xf32>
    %266 = tpu.matmul %264, %210, %cst_45 {dimension_numbers = #tpu.dot_dimension_numbers<[1], [0], [0], [1], [0, 0, 1, 1], [], []>} : vector<4x32xf32>, vector<32x96xf32>, vector<4x96xf32> -> vector<4x96xf32>
    %267 = vector.broadcast %212 : vector<1x96xf32> to vector<4x96xf32>
    %268 = arith.addf %266, %267 : vector<4x96xf32>
    %269 = vector.extract_strided_slice %265 {offsets = [0, 0], sizes = [4, 64], strides = [1, 1]} : vector<4x96xf32> to vector<4x64xf32>
    %270 = vector.extract_strided_slice %268 {offsets = [0, 0], sizes = [4, 64], strides = [1, 1]} : vector<4x96xf32> to vector<4x64xf32>
    %271 = arith.addf %269, %270 : vector<4x64xf32>
    %272 = arith.negf %271 : vector<4x64xf32>
    %273 = math.exp %272 : vector<4x64xf32>
    %cst_46 = arith.constant 1.000000e+00 : f32
    %274 = vector.broadcast %cst_46 : f32 to vector<4x64xf32>
    %275 = arith.addf %274, %273 : vector<4x64xf32>
    %276 = arith.divf %274, %275 : vector<4x64xf32>
    %277 = vector.extract_strided_slice %276 {offsets = [0, 0], sizes = [4, 32], strides = [1, 1]} : vector<4x64xf32> to vector<4x32xf32>
    %278 = vector.extract_strided_slice %276 {offsets = [0, 32], sizes = [4, 32], strides = [1, 1]} : vector<4x64xf32> to vector<4x32xf32>
    %279 = vector.extract_strided_slice %265 {offsets = [0, 64], sizes = [4, 32], strides = [1, 1]} : vector<4x96xf32> to vector<4x32xf32>
    %280 = vector.extract_strided_slice %268 {offsets = [0, 64], sizes = [4, 32], strides = [1, 1]} : vector<4x96xf32> to vector<4x32xf32>
    %281 = arith.mulf %277, %280 : vector<4x32xf32>
    %282 = arith.addf %279, %281 : vector<4x32xf32>
    %283 = math.tanh %282 : vector<4x32xf32>
    %cst_47 = arith.constant 1.000000e+00 : f32
    %284 = vector.broadcast %cst_47 : f32 to vector<4x32xf32>
    %285 = arith.subf %284, %278 : vector<4x32xf32>
    %286 = arith.mulf %285, %283 : vector<4x32xf32>
    %287 = arith.mulf %278, %264 : vector<4x32xf32>
    %288 = arith.addf %286, %287 : vector<4x32xf32>
    %289 = vector.extract_strided_slice %215 {offsets = [12, 0], sizes = [4, 96], strides = [1, 1]} : vector<32x96xf32> to vector<4x96xf32>
    %cst_48 = arith.constant dense<0.000000e+00> : vector<4x96xf32>
    %290 = tpu.matmul %288, %210, %cst_48 {dimension_numbers = #tpu.dot_dimension_numbers<[1], [0], [0], [1], [0, 0, 1, 1], [], []>} : vector<4x32xf32>, vector<32x96xf32>, vector<4x96xf32> -> vector<4x96xf32>
    %291 = vector.broadcast %212 : vector<1x96xf32> to vector<4x96xf32>
    %292 = arith.addf %290, %291 : vector<4x96xf32>
    %293 = vector.extract_strided_slice %289 {offsets = [0, 0], sizes = [4, 64], strides = [1, 1]} : vector<4x96xf32> to vector<4x64xf32>
    %294 = vector.extract_strided_slice %292 {offsets = [0, 0], sizes = [4, 64], strides = [1, 1]} : vector<4x96xf32> to vector<4x64xf32>
    %295 = arith.addf %293, %294 : vector<4x64xf32>
    %296 = arith.negf %295 : vector<4x64xf32>
    %297 = math.exp %296 : vector<4x64xf32>
    %cst_49 = arith.constant 1.000000e+00 : f32
    %298 = vector.broadcast %cst_49 : f32 to vector<4x64xf32>
    %299 = arith.addf %298, %297 : vector<4x64xf32>
    %300 = arith.divf %298, %299 : vector<4x64xf32>
    %301 = vector.extract_strided_slice %300 {offsets = [0, 0], sizes = [4, 32], strides = [1, 1]} : vector<4x64xf32> to vector<4x32xf32>
    %302 = vector.extract_strided_slice %300 {offsets = [0, 32], sizes = [4, 32], strides = [1, 1]} : vector<4x64xf32> to vector<4x32xf32>
    %303 = vector.extract_strided_slice %289 {offsets = [0, 64], sizes = [4, 32], strides = [1, 1]} : vector<4x96xf32> to vector<4x32xf32>
    %304 = vector.extract_strided_slice %292 {offsets = [0, 64], sizes = [4, 32], strides = [1, 1]} : vector<4x96xf32> to vector<4x32xf32>
    %305 = arith.mulf %301, %304 : vector<4x32xf32>
    %306 = arith.addf %303, %305 : vector<4x32xf32>
    %307 = math.tanh %306 : vector<4x32xf32>
    %cst_50 = arith.constant 1.000000e+00 : f32
    %308 = vector.broadcast %cst_50 : f32 to vector<4x32xf32>
    %309 = arith.subf %308, %302 : vector<4x32xf32>
    %310 = arith.mulf %309, %307 : vector<4x32xf32>
    %311 = arith.mulf %302, %288 : vector<4x32xf32>
    %312 = arith.addf %310, %311 : vector<4x32xf32>
    %313 = vector.extract_strided_slice %215 {offsets = [16, 0], sizes = [4, 96], strides = [1, 1]} : vector<32x96xf32> to vector<4x96xf32>
    %cst_51 = arith.constant dense<0.000000e+00> : vector<4x96xf32>
    %314 = tpu.matmul %312, %210, %cst_51 {dimension_numbers = #tpu.dot_dimension_numbers<[1], [0], [0], [1], [0, 0, 1, 1], [], []>} : vector<4x32xf32>, vector<32x96xf32>, vector<4x96xf32> -> vector<4x96xf32>
    %315 = vector.broadcast %212 : vector<1x96xf32> to vector<4x96xf32>
    %316 = arith.addf %314, %315 : vector<4x96xf32>
    %317 = vector.extract_strided_slice %313 {offsets = [0, 0], sizes = [4, 64], strides = [1, 1]} : vector<4x96xf32> to vector<4x64xf32>
    %318 = vector.extract_strided_slice %316 {offsets = [0, 0], sizes = [4, 64], strides = [1, 1]} : vector<4x96xf32> to vector<4x64xf32>
    %319 = arith.addf %317, %318 : vector<4x64xf32>
    %320 = arith.negf %319 : vector<4x64xf32>
    %321 = math.exp %320 : vector<4x64xf32>
    %cst_52 = arith.constant 1.000000e+00 : f32
    %322 = vector.broadcast %cst_52 : f32 to vector<4x64xf32>
    %323 = arith.addf %322, %321 : vector<4x64xf32>
    %324 = arith.divf %322, %323 : vector<4x64xf32>
    %325 = vector.extract_strided_slice %324 {offsets = [0, 0], sizes = [4, 32], strides = [1, 1]} : vector<4x64xf32> to vector<4x32xf32>
    %326 = vector.extract_strided_slice %324 {offsets = [0, 32], sizes = [4, 32], strides = [1, 1]} : vector<4x64xf32> to vector<4x32xf32>
    %327 = vector.extract_strided_slice %313 {offsets = [0, 64], sizes = [4, 32], strides = [1, 1]} : vector<4x96xf32> to vector<4x32xf32>
    %328 = vector.extract_strided_slice %316 {offsets = [0, 64], sizes = [4, 32], strides = [1, 1]} : vector<4x96xf32> to vector<4x32xf32>
    %329 = arith.mulf %325, %328 : vector<4x32xf32>
    %330 = arith.addf %327, %329 : vector<4x32xf32>
    %331 = math.tanh %330 : vector<4x32xf32>
    %cst_53 = arith.constant 1.000000e+00 : f32
    %332 = vector.broadcast %cst_53 : f32 to vector<4x32xf32>
    %333 = arith.subf %332, %326 : vector<4x32xf32>
    %334 = arith.mulf %333, %331 : vector<4x32xf32>
    %335 = arith.mulf %326, %312 : vector<4x32xf32>
    %336 = arith.addf %334, %335 : vector<4x32xf32>
    %337 = vector.extract_strided_slice %215 {offsets = [20, 0], sizes = [4, 96], strides = [1, 1]} : vector<32x96xf32> to vector<4x96xf32>
    %cst_54 = arith.constant dense<0.000000e+00> : vector<4x96xf32>
    %338 = tpu.matmul %336, %210, %cst_54 {dimension_numbers = #tpu.dot_dimension_numbers<[1], [0], [0], [1], [0, 0, 1, 1], [], []>} : vector<4x32xf32>, vector<32x96xf32>, vector<4x96xf32> -> vector<4x96xf32>
    %339 = vector.broadcast %212 : vector<1x96xf32> to vector<4x96xf32>
    %340 = arith.addf %338, %339 : vector<4x96xf32>
    %341 = vector.extract_strided_slice %337 {offsets = [0, 0], sizes = [4, 64], strides = [1, 1]} : vector<4x96xf32> to vector<4x64xf32>
    %342 = vector.extract_strided_slice %340 {offsets = [0, 0], sizes = [4, 64], strides = [1, 1]} : vector<4x96xf32> to vector<4x64xf32>
    %343 = arith.addf %341, %342 : vector<4x64xf32>
    %344 = arith.negf %343 : vector<4x64xf32>
    %345 = math.exp %344 : vector<4x64xf32>
    %cst_55 = arith.constant 1.000000e+00 : f32
    %346 = vector.broadcast %cst_55 : f32 to vector<4x64xf32>
    %347 = arith.addf %346, %345 : vector<4x64xf32>
    %348 = arith.divf %346, %347 : vector<4x64xf32>
    %349 = vector.extract_strided_slice %348 {offsets = [0, 0], sizes = [4, 32], strides = [1, 1]} : vector<4x64xf32> to vector<4x32xf32>
    %350 = vector.extract_strided_slice %348 {offsets = [0, 32], sizes = [4, 32], strides = [1, 1]} : vector<4x64xf32> to vector<4x32xf32>
    %351 = vector.extract_strided_slice %337 {offsets = [0, 64], sizes = [4, 32], strides = [1, 1]} : vector<4x96xf32> to vector<4x32xf32>
    %352 = vector.extract_strided_slice %340 {offsets = [0, 64], sizes = [4, 32], strides = [1, 1]} : vector<4x96xf32> to vector<4x32xf32>
    %353 = arith.mulf %349, %352 : vector<4x32xf32>
    %354 = arith.addf %351, %353 : vector<4x32xf32>
    %355 = math.tanh %354 : vector<4x32xf32>
    %cst_56 = arith.constant 1.000000e+00 : f32
    %356 = vector.broadcast %cst_56 : f32 to vector<4x32xf32>
    %357 = arith.subf %356, %350 : vector<4x32xf32>
    %358 = arith.mulf %357, %355 : vector<4x32xf32>
    %359 = arith.mulf %350, %336 : vector<4x32xf32>
    %360 = arith.addf %358, %359 : vector<4x32xf32>
    %361 = vector.extract_strided_slice %215 {offsets = [24, 0], sizes = [4, 96], strides = [1, 1]} : vector<32x96xf32> to vector<4x96xf32>
    %cst_57 = arith.constant dense<0.000000e+00> : vector<4x96xf32>
    %362 = tpu.matmul %360, %210, %cst_57 {dimension_numbers = #tpu.dot_dimension_numbers<[1], [0], [0], [1], [0, 0, 1, 1], [], []>} : vector<4x32xf32>, vector<32x96xf32>, vector<4x96xf32> -> vector<4x96xf32>
    %363 = vector.broadcast %212 : vector<1x96xf32> to vector<4x96xf32>
    %364 = arith.addf %362, %363 : vector<4x96xf32>
    %365 = vector.extract_strided_slice %361 {offsets = [0, 0], sizes = [4, 64], strides = [1, 1]} : vector<4x96xf32> to vector<4x64xf32>
    %366 = vector.extract_strided_slice %364 {offsets = [0, 0], sizes = [4, 64], strides = [1, 1]} : vector<4x96xf32> to vector<4x64xf32>
    %367 = arith.addf %365, %366 : vector<4x64xf32>
    %368 = arith.negf %367 : vector<4x64xf32>
    %369 = math.exp %368 : vector<4x64xf32>
    %cst_58 = arith.constant 1.000000e+00 : f32
    %370 = vector.broadcast %cst_58 : f32 to vector<4x64xf32>
    %371 = arith.addf %370, %369 : vector<4x64xf32>
    %372 = arith.divf %370, %371 : vector<4x64xf32>
    %373 = vector.extract_strided_slice %372 {offsets = [0, 0], sizes = [4, 32], strides = [1, 1]} : vector<4x64xf32> to vector<4x32xf32>
    %374 = vector.extract_strided_slice %372 {offsets = [0, 32], sizes = [4, 32], strides = [1, 1]} : vector<4x64xf32> to vector<4x32xf32>
    %375 = vector.extract_strided_slice %361 {offsets = [0, 64], sizes = [4, 32], strides = [1, 1]} : vector<4x96xf32> to vector<4x32xf32>
    %376 = vector.extract_strided_slice %364 {offsets = [0, 64], sizes = [4, 32], strides = [1, 1]} : vector<4x96xf32> to vector<4x32xf32>
    %377 = arith.mulf %373, %376 : vector<4x32xf32>
    %378 = arith.addf %375, %377 : vector<4x32xf32>
    %379 = math.tanh %378 : vector<4x32xf32>
    %cst_59 = arith.constant 1.000000e+00 : f32
    %380 = vector.broadcast %cst_59 : f32 to vector<4x32xf32>
    %381 = arith.subf %380, %374 : vector<4x32xf32>
    %382 = arith.mulf %381, %379 : vector<4x32xf32>
    %383 = arith.mulf %374, %360 : vector<4x32xf32>
    %384 = arith.addf %382, %383 : vector<4x32xf32>
    %385 = vector.extract_strided_slice %215 {offsets = [28, 0], sizes = [4, 96], strides = [1, 1]} : vector<32x96xf32> to vector<4x96xf32>
    %cst_60 = arith.constant dense<0.000000e+00> : vector<4x96xf32>
    %386 = tpu.matmul %384, %210, %cst_60 {dimension_numbers = #tpu.dot_dimension_numbers<[1], [0], [0], [1], [0, 0, 1, 1], [], []>} : vector<4x32xf32>, vector<32x96xf32>, vector<4x96xf32> -> vector<4x96xf32>
    %387 = vector.broadcast %212 : vector<1x96xf32> to vector<4x96xf32>
    %388 = arith.addf %386, %387 : vector<4x96xf32>
    %389 = vector.extract_strided_slice %385 {offsets = [0, 0], sizes = [4, 64], strides = [1, 1]} : vector<4x96xf32> to vector<4x64xf32>
    %390 = vector.extract_strided_slice %388 {offsets = [0, 0], sizes = [4, 64], strides = [1, 1]} : vector<4x96xf32> to vector<4x64xf32>
    %391 = arith.addf %389, %390 : vector<4x64xf32>
    %392 = arith.negf %391 : vector<4x64xf32>
    %393 = math.exp %392 : vector<4x64xf32>
    %cst_61 = arith.constant 1.000000e+00 : f32
    %394 = vector.broadcast %cst_61 : f32 to vector<4x64xf32>
    %395 = arith.addf %394, %393 : vector<4x64xf32>
    %396 = arith.divf %394, %395 : vector<4x64xf32>
    %397 = vector.extract_strided_slice %396 {offsets = [0, 0], sizes = [4, 32], strides = [1, 1]} : vector<4x64xf32> to vector<4x32xf32>
    %398 = vector.extract_strided_slice %396 {offsets = [0, 32], sizes = [4, 32], strides = [1, 1]} : vector<4x64xf32> to vector<4x32xf32>
    %399 = vector.extract_strided_slice %385 {offsets = [0, 64], sizes = [4, 32], strides = [1, 1]} : vector<4x96xf32> to vector<4x32xf32>
    %400 = vector.extract_strided_slice %388 {offsets = [0, 64], sizes = [4, 32], strides = [1, 1]} : vector<4x96xf32> to vector<4x32xf32>
    %401 = arith.mulf %397, %400 : vector<4x32xf32>
    %402 = arith.addf %399, %401 : vector<4x32xf32>
    %403 = math.tanh %402 : vector<4x32xf32>
    %cst_62 = arith.constant 1.000000e+00 : f32
    %404 = vector.broadcast %cst_62 : f32 to vector<4x32xf32>
    %405 = arith.subf %404, %398 : vector<4x32xf32>
    %406 = arith.mulf %405, %403 : vector<4x32xf32>
    %407 = arith.mulf %398, %384 : vector<4x32xf32>
    %408 = arith.addf %406, %407 : vector<4x32xf32>
    %409 = tpu.concatenate %240, %264, %288, %312, %336, %360, %384, %408 in 1 : vector<4x32xf32>, vector<4x32xf32>, vector<4x32xf32>, vector<4x32xf32>, vector<4x32xf32>, vector<4x32xf32>, vector<4x32xf32>, vector<4x32xf32> -> vector<4x256xf32>
    %c0_63 = arith.constant 0 : index
    %c0_64 = arith.constant 0 : index
    %410 = vector.load %arg1[%c0_63, %c0_64] : memref<4x256xf32, #tpu.memory_space<vmem>>, vector<4x256xf32>
    %411 = arith.mulf %409, %410 : vector<4x256xf32>
    %c384 = arith.constant 384 : index
    %c0_65 = arith.constant 0 : index
    %412 = vector.load %arg2[%c384, %c0_65] : memref<848x128xf32, #tpu.memory_space<vmem>>, vector<256x32xf32>
    %cst_66 = arith.constant dense<0.000000e+00> : vector<4x32xf32>
    %413 = tpu.matmul %411, %412, %cst_66 {dimension_numbers = #tpu.dot_dimension_numbers<[1], [0], [0], [1], [0, 0, 1, 1], [], []>} : vector<4x256xf32>, vector<256x32xf32>, vector<4x32xf32> -> vector<4x32xf32>
    %c784 = arith.constant 784 : index
    %c0_67 = arith.constant 0 : index
    %414 = vector.load %arg2[%c784, %c0_67] : memref<848x128xf32, #tpu.memory_space<vmem>>, vector<1x32xf32>
    %c808 = arith.constant 808 : index
    %c0_68 = arith.constant 0 : index
    %415 = vector.load %arg2[%c808, %c0_68] : memref<848x128xf32, #tpu.memory_space<vmem>>, vector<1x32xf32>
    %cst_69 = arith.constant dense<0.000000e+00> : vector<32xf32>
    %416 = vector.multi_reduction <add>, %413, %cst_69 [0] : vector<4x32xf32> to vector<32xf32>
    %417 = vector.shape_cast %416 : vector<32xf32> to vector<1x32xf32>
    %cst_70 = arith.constant 4.000000e+00 : f32
    %418 = vector.broadcast %cst_70 : f32 to vector<1x32xf32>
    %419 = arith.divf %417, %418 : vector<1x32xf32>
    %420 = vector.broadcast %419 : vector<1x32xf32> to vector<4x32xf32>
    %421 = arith.subf %413, %420 : vector<4x32xf32>
    %422 = arith.mulf %421, %421 : vector<4x32xf32>
    %cst_71 = arith.constant dense<0.000000e+00> : vector<32xf32>
    %423 = vector.multi_reduction <add>, %422, %cst_71 [0] : vector<4x32xf32> to vector<32xf32>
    %424 = vector.shape_cast %423 : vector<32xf32> to vector<1x32xf32>
    %cst_72 = arith.constant 4.000000e+00 : f32
    %425 = vector.broadcast %cst_72 : f32 to vector<1x32xf32>
    %426 = arith.divf %424, %425 : vector<1x32xf32>
    %cst_73 = arith.constant 9.99999974E-6 : f32
    %427 = vector.broadcast %cst_73 : f32 to vector<1x32xf32>
    %428 = arith.addf %426, %427 : vector<1x32xf32>
    %429 = math.rsqrt %428 : vector<1x32xf32>
    %430 = vector.broadcast %429 : vector<1x32xf32> to vector<4x32xf32>
    %431 = arith.mulf %421, %430 : vector<4x32xf32>
    %432 = vector.broadcast %414 : vector<1x32xf32> to vector<4x32xf32>
    %433 = arith.mulf %431, %432 : vector<4x32xf32>
    %434 = vector.broadcast %415 : vector<1x32xf32> to vector<4x32xf32>
    %435 = arith.addf %433, %434 : vector<4x32xf32>
    %cst_74 = arith.constant 0.000000e+00 : f32
    %436 = vector.broadcast %cst_74 : f32 to vector<4x32xf32>
    %437 = arith.maximumf %435, %436 : vector<4x32xf32>
    %c640 = arith.constant 640 : index
    %c0_75 = arith.constant 0 : index
    %438 = vector.load %arg2[%c640, %c0_75] : memref<848x128xf32, #tpu.memory_space<vmem>>, vector<32x32xf32>
    %cst_76 = arith.constant dense<0.000000e+00> : vector<4x32xf32>
    %439 = tpu.matmul %437, %438, %cst_76 {dimension_numbers = #tpu.dot_dimension_numbers<[1], [0], [0], [1], [0, 0, 1, 1], [], []>} : vector<4x32xf32>, vector<32x32xf32>, vector<4x32xf32> -> vector<4x32xf32>
    %c792 = arith.constant 792 : index
    %c0_77 = arith.constant 0 : index
    %440 = vector.load %arg2[%c792, %c0_77] : memref<848x128xf32, #tpu.memory_space<vmem>>, vector<1x32xf32>
    %c816 = arith.constant 816 : index
    %c0_78 = arith.constant 0 : index
    %441 = vector.load %arg2[%c816, %c0_78] : memref<848x128xf32, #tpu.memory_space<vmem>>, vector<1x32xf32>
    %cst_79 = arith.constant dense<0.000000e+00> : vector<32xf32>
    %442 = vector.multi_reduction <add>, %439, %cst_79 [0] : vector<4x32xf32> to vector<32xf32>
    %443 = vector.shape_cast %442 : vector<32xf32> to vector<1x32xf32>
    %cst_80 = arith.constant 4.000000e+00 : f32
    %444 = vector.broadcast %cst_80 : f32 to vector<1x32xf32>
    %445 = arith.divf %443, %444 : vector<1x32xf32>
    %446 = vector.broadcast %445 : vector<1x32xf32> to vector<4x32xf32>
    %447 = arith.subf %439, %446 : vector<4x32xf32>
    %448 = arith.mulf %447, %447 : vector<4x32xf32>
    %cst_81 = arith.constant dense<0.000000e+00> : vector<32xf32>
    %449 = vector.multi_reduction <add>, %448, %cst_81 [0] : vector<4x32xf32> to vector<32xf32>
    %450 = vector.shape_cast %449 : vector<32xf32> to vector<1x32xf32>
    %cst_82 = arith.constant 4.000000e+00 : f32
    %451 = vector.broadcast %cst_82 : f32 to vector<1x32xf32>
    %452 = arith.divf %450, %451 : vector<1x32xf32>
    %cst_83 = arith.constant 9.99999974E-6 : f32
    %453 = vector.broadcast %cst_83 : f32 to vector<1x32xf32>
    %454 = arith.addf %452, %453 : vector<1x32xf32>
    %455 = math.rsqrt %454 : vector<1x32xf32>
    %456 = vector.broadcast %455 : vector<1x32xf32> to vector<4x32xf32>
    %457 = arith.mulf %447, %456 : vector<4x32xf32>
    %458 = vector.broadcast %440 : vector<1x32xf32> to vector<4x32xf32>
    %459 = arith.mulf %457, %458 : vector<4x32xf32>
    %460 = vector.broadcast %441 : vector<1x32xf32> to vector<4x32xf32>
    %461 = arith.addf %459, %460 : vector<4x32xf32>
    %cst_84 = arith.constant 0.000000e+00 : f32
    %462 = vector.broadcast %cst_84 : f32 to vector<4x32xf32>
    %463 = arith.maximumf %461, %462 : vector<4x32xf32>
    %c672 = arith.constant 672 : index
    %c0_85 = arith.constant 0 : index
    %464 = vector.load %arg2[%c672, %c0_85] : memref<848x128xf32, #tpu.memory_space<vmem>>, vector<32x32xf32>
    %cst_86 = arith.constant dense<0.000000e+00> : vector<4x32xf32>
    %465 = tpu.matmul %463, %464, %cst_86 {dimension_numbers = #tpu.dot_dimension_numbers<[1], [0], [0], [1], [0, 0, 1, 1], [], []>} : vector<4x32xf32>, vector<32x32xf32>, vector<4x32xf32> -> vector<4x32xf32>
    %c800 = arith.constant 800 : index
    %c0_87 = arith.constant 0 : index
    %466 = vector.load %arg2[%c800, %c0_87] : memref<848x128xf32, #tpu.memory_space<vmem>>, vector<1x32xf32>
    %c824 = arith.constant 824 : index
    %c0_88 = arith.constant 0 : index
    %467 = vector.load %arg2[%c824, %c0_88] : memref<848x128xf32, #tpu.memory_space<vmem>>, vector<1x32xf32>
    %cst_89 = arith.constant dense<0.000000e+00> : vector<32xf32>
    %468 = vector.multi_reduction <add>, %465, %cst_89 [0] : vector<4x32xf32> to vector<32xf32>
    %469 = vector.shape_cast %468 : vector<32xf32> to vector<1x32xf32>
    %cst_90 = arith.constant 4.000000e+00 : f32
    %470 = vector.broadcast %cst_90 : f32 to vector<1x32xf32>
    %471 = arith.divf %469, %470 : vector<1x32xf32>
    %472 = vector.broadcast %471 : vector<1x32xf32> to vector<4x32xf32>
    %473 = arith.subf %465, %472 : vector<4x32xf32>
    %474 = arith.mulf %473, %473 : vector<4x32xf32>
    %cst_91 = arith.constant dense<0.000000e+00> : vector<32xf32>
    %475 = vector.multi_reduction <add>, %474, %cst_91 [0] : vector<4x32xf32> to vector<32xf32>
    %476 = vector.shape_cast %475 : vector<32xf32> to vector<1x32xf32>
    %cst_92 = arith.constant 4.000000e+00 : f32
    %477 = vector.broadcast %cst_92 : f32 to vector<1x32xf32>
    %478 = arith.divf %476, %477 : vector<1x32xf32>
    %cst_93 = arith.constant 9.99999974E-6 : f32
    %479 = vector.broadcast %cst_93 : f32 to vector<1x32xf32>
    %480 = arith.addf %478, %479 : vector<1x32xf32>
    %481 = math.rsqrt %480 : vector<1x32xf32>
    %482 = vector.broadcast %481 : vector<1x32xf32> to vector<4x32xf32>
    %483 = arith.mulf %473, %482 : vector<4x32xf32>
    %484 = vector.broadcast %466 : vector<1x32xf32> to vector<4x32xf32>
    %485 = arith.mulf %483, %484 : vector<4x32xf32>
    %486 = vector.broadcast %467 : vector<1x32xf32> to vector<4x32xf32>
    %487 = arith.addf %485, %486 : vector<4x32xf32>
    %c704 = arith.constant 704 : index
    %c0_94 = arith.constant 0 : index
    %488 = vector.load %arg2[%c704, %c0_94] : memref<848x128xf32, #tpu.memory_space<vmem>>, vector<32x16xf32>
    %cst_95 = arith.constant dense<0.000000e+00> : vector<4x16xf32>
    %489 = tpu.matmul %487, %488, %cst_95 {dimension_numbers = #tpu.dot_dimension_numbers<[1], [0], [0], [1], [0, 0, 1, 1], [], []>} : vector<4x32xf32>, vector<32x16xf32>, vector<4x16xf32> -> vector<4x16xf32>
    %c832 = arith.constant 832 : index
    %c0_96 = arith.constant 0 : index
    %490 = vector.load %arg2[%c832, %c0_96] : memref<848x128xf32, #tpu.memory_space<vmem>>, vector<1x16xf32>
    %491 = vector.broadcast %490 : vector<1x16xf32> to vector<4x16xf32>
    %492 = arith.addf %489, %491 : vector<4x16xf32>
    %cst_97 = arith.constant 0.000000e+00 : f32
    %493 = vector.broadcast %cst_97 : f32 to vector<4x16xf32>
    %494 = arith.maximumf %492, %493 : vector<4x16xf32>
    %495 = vector.broadcast %cst_97 : f32 to vector<4x16xf32>
    %496 = arith.subf %492, %495 : vector<4x16xf32>
    %497 = arith.cmpf one, %496, %496 : vector<4x16xf32>
    %498 = vector.broadcast %cst_97 : f32 to vector<4x16xf32>
    %499 = arith.addf %492, %498 : vector<4x16xf32>
    %500 = math.absf %496 : vector<4x16xf32>
    %cst_98 = arith.constant 0.000000e+00 : f32
    %501 = vector.broadcast %cst_98 : f32 to vector<4x16xf32>
    %502 = arith.subf %501, %500 : vector<4x16xf32>
    %503 = math.exp %502 : vector<4x16xf32>
    %504 = math.log1p %503 : vector<4x16xf32>
    %505 = arith.addf %494, %504 : vector<4x16xf32>
    %506 = arith.select %497, %499, %505 : vector<4x16xi1>, vector<4x16xf32>
    %c736 = arith.constant 736 : index
    %c0_99 = arith.constant 0 : index
    %507 = vector.load %arg2[%c736, %c0_99] : memref<848x128xf32, #tpu.memory_space<vmem>>, vector<16x2xf32>
    %cst_100 = arith.constant dense<0.000000e+00> : vector<4x2xf32>
    %508 = tpu.matmul %506, %507, %cst_100 {dimension_numbers = #tpu.dot_dimension_numbers<[1], [0], [0], [1], [0, 0, 1, 1], [], []>} : vector<4x16xf32>, vector<16x2xf32>, vector<4x2xf32> -> vector<4x2xf32>
    %c840 = arith.constant 840 : index
    %c0_101 = arith.constant 0 : index
    %509 = vector.load %arg2[%c840, %c0_101] : memref<848x128xf32, #tpu.memory_space<vmem>>, vector<1x2xf32>
    %510 = vector.broadcast %509 : vector<1x2xf32> to vector<4x2xf32>
    %511 = arith.addf %508, %510 : vector<4x2xf32>
    %c0_102 = arith.constant 0 : index
    %c0_103 = arith.constant 0 : index
    %512 = vector.load %arg3[%c0_102, %c0_103] : memref<4x2xf32, #tpu.memory_space<vmem>>, vector<4x2xf32>
    tpu.vector_store %arg3[%c0_102, %c0_103], %511 {strides = array<i32>} : memref<4x2xf32, #tpu.memory_space<vmem>>, vector<4x2xf32>,
    return
  }
}

</mosaic_0001>

<llo_original>
// kernel: seq_encoder_forward.1
$region0: #{seq_encoder_forward.1}
  #allocation0 [shape = 'u32[]', space=smem, size = 0x4, offset = 0x4, fixed_abs, tag = 'smem constant byte address 0x4 - core index']
  #allocation1 [shape = 'u32[72,128]{1,0:T(1,128)}', space=vmem, size = 0x9000, scoped, tag = 'internal scratch']
  %s0 = inlined_call_operand.vmem [shape: s32[32,1], index: 0, kind: input, shape index: {}]
  %s1 = inlined_call_operand.vmem [shape: f32[4,256], index: 1, kind: input, shape index: {}]
  %s2 = inlined_call_operand.hbm [shape: f32[848,128], index: 2, kind: input, shape index: {}]
  %s3 = inlined_call_operand.vmem [shape: f32[4,2], index: 3, kind: output, shape index: {}]
  %s4 = sld [smem:[#allocation0]]
  $region26: #{seq_encoder_forward.1} parent=0
    _
  %s6 = ssub.s32 1, %s4
  %s7 = scalar_select 0, %s6, %s4
  $region1: #{seq_encoder_forward.1} parent=0
    #allocation2 [shape = 'u8[434176]{0}', space=vmem, size = 0x6a000, scoped, tag = 'input window, operand 2, single buffered']
    #allocation3 [shape = 's32[1]{0}', space=sflag, size = 0x4, scoped, tag = 'scoped memory for seq_encoder_forward.1']
    %8 = vsyncpa [#allocation3], 0
    // Predicated region
    $region2: #{seq_encoder_forward.1} parent=1 // pred_check
      _
    $region3: #{seq_encoder_forward.1} parent=1 // pred_check_branch
      %10 = sbr.rel (0) target = $region5
    $region4: #{seq_encoder_forward.1} parent=1 // pred_region
      _
    $region5: #{seq_encoder_forward.1} parent=1 // pred_fallthru
      _
    // Predicated region
    $region6: #{seq_encoder_forward.1} parent=1 // pred_check
      _
    $region7: #{seq_encoder_forward.1} parent=1 // pred_check_branch
      %12 = sbr.rel (0) target = $region9
    $region8: #{seq_encoder_forward.1} parent=1 // pred_region
      _
    $region9: #{seq_encoder_forward.1} parent=1 // pred_fallthru
      _
    // Predicated region
    $region10: #{seq_encoder_forward.1} parent=1 // pred_check
      _
    $region11: #{seq_encoder_forward.1} parent=1 // pred_check_branch
      %14 = sbr.rel (0) target = $region13
    $region12: #{seq_encoder_forward.1} parent=1 // pred_region
      %16 = vsyncadd [#allocation3], 0
      %s17 = sshll.u32 %s2, 4
      %s18 = int_to_ptr.hbm [resolvable:$true] %s17
      %s19 = sshll.u32 [#allocation2], 4
      %s20 = int_to_ptr.vmem [resolvable:$true] %s19
      %25 = dma.hbm_to_vmem [thread:$0]  %s18, 13568, %s20, [#allocation3], 128, 128, 8
    $region13: #{seq_encoder_forward.1} parent=1 // pred_fallthru
      _
    // Predicated region
    $region14: #{seq_encoder_forward.1} parent=1 // pred_check
      _
    $region15: #{seq_encoder_forward.1} parent=1 // pred_check_branch
      %27 = sbr.rel (0) target = $region17
    $region16: #{seq_encoder_forward.1} parent=1 // pred_region
      %29 = dma.done [#allocation3], 13568
    $region17: #{seq_encoder_forward.1} parent=1 // pred_fallthru
      _
    %v30 = vld [vmem:[%s0] sm:$0xff]
    %v31 = vld [vmem:[%s0 + $0x8] sm:$0xff]
    %v32 = vld [vmem:[%s0 + $0x10] sm:$0xff]
    %v33 = vld [vmem:[%s0 + $0x18] sm:$0xff]
    %v34 = vlaneseq
    %v35 = vand.u32 %v34, 127
    %v36 = vadd.s32 %v35, 128
    %37 = vset.pattern.permute.xlu0 0
    %38 = vperm.xlu0 %37, %v30
    %v39 = vpop.permute.xlu0 %38
    %40 = vset.pattern.permute.xlu0 0
    %41 = vperm.xlu0 %40, %v31
    %v42 = vpop.permute.xlu0 %41
    %43 = vset.pattern.permute.xlu0 0
    %44 = vperm.xlu0 %43, %v32
    %v45 = vpop.permute.xlu0 %44
    %46 = vset.pattern.permute.xlu0 0
    %47 = vperm.xlu0 %46, %v33
    %v48 = vpop.permute.xlu0 %47
    %vm49 = vcmp.eq.s32.totalorder %v35, %v39
    %vm50 = vcmp.eq.s32.totalorder %v36, %v39
    %vm51 = vcmp.eq.s32.totalorder %v35, %v42
    %vm52 = vcmp.eq.s32.totalorder %v36, %v42
    %vm53 = vcmp.eq.s32.totalorder %v35, %v45
    %vm54 = vcmp.eq.s32.totalorder %v36, %v45
    %vm55 = vcmp.eq.s32.totalorder %v35, %v48
    %vm56 = vcmp.eq.s32.totalorder %v36, %v48
    %v57 = vsel %vm49, 1, 0
    %v58 = vsel %vm50, 1, 0
    %v59 = vsel %vm51, 1, 0
    %v60 = vsel %vm52, 1, 0
    %v61 = vsel %vm53, 1, 0
    %v62 = vsel %vm54, 1, 0
    %v63 = vsel %vm55, 1, 0
    %v64 = vsel %vm56, 1, 0
    %v65 = vcvt.s32.f32 %v57
    %v66 = vcvt.s32.f32 %v58
    %v67 = vcvt.s32.f32 %v59
    %v68 = vcvt.s32.f32 %v60
    %v69 = vcvt.s32.f32 %v61
    %v70 = vcvt.s32.f32 %v62
    %v71 = vcvt.s32.f32 %v63
    %v72 = vcvt.s32.f32 %v64
    %v73 = vld [vmem:[#allocation2] sm:$0xff]
    %v74 = vld [vmem:[#allocation2 + $0x8] sm:$0xff]
    %v75 = vld [vmem:[#allocation2 + $0x10] sm:$0xff]
    %v76 = vld [vmem:[#allocation2 + $0x18] sm:$0xff]
    %v77 = vld [vmem:[#allocation2 + $0x20] sm:$0xff]
    %v78 = vld [vmem:[#allocation2 + $0x28] sm:$0xff]
    %v79 = vld [vmem:[#allocation2 + $0x30] sm:$0xff]
    %v80 = vld [vmem:[#allocation2 + $0x38] sm:$0xff]
    %v81 = vld [vmem:[#allocation2 + $0x40] sm:$0xff]
    %v82 = vld [vmem:[#allocation2 + $0x48] sm:$0xff]
    %v83 = vld [vmem:[#allocation2 + $0x50] sm:$0xff]
    %v84 = vld [vmem:[#allocation2 + $0x58] sm:$0xff]
    %v85 = vld [vmem:[#allocation2 + $0x60] sm:$0xff]
    %v86 = vld [vmem:[#allocation2 + $0x68] sm:$0xff]
    %v87 = vld [vmem:[#allocation2 + $0x70] sm:$0xff]
    %v88 = vld [vmem:[#allocation2 + $0x78] sm:$0xff]
    %v89 = vld [vmem:[#allocation2 + $0x80] sm:$0xff]
    %v90 = vld [vmem:[#allocation2 + $0x88] sm:$0xff]
    %v91 = vld [vmem:[#allocation2 + $0x90] sm:$0xff]
    %v92 = vld [vmem:[#allocation2 + $0x98] sm:$0xff]
    %v93 = vld [vmem:[#allocation2 + $0xa0] sm:$0xff]
    %v94 = vld [vmem:[#allocation2 + $0xa8] sm:$0xff]
    %v95 = vld [vmem:[#allocation2 + $0xb0] sm:$0xff]
    %v96 = vld [vmem:[#allocation2 + $0xb8] sm:$0xff]
    %v97 = vld [vmem:[#allocation2 + $0xc0] sm:$0xff]
    %v98 = vld [vmem:[#allocation2 + $0xc8] sm:$0xff]
    %v99 = vld [vmem:[#allocation2 + $0xd0] sm:$0xff]
    %v100 = vld [vmem:[#allocation2 + $0xd8] sm:$0xff]
    %v101 = vld [vmem:[#allocation2 + $0xe0] sm:$0xff]
    %v102 = vld [vmem:[#allocation2 + $0xe8] sm:$0xff]
    %v103 = vld [vmem:[#allocation2 + $0xf0] sm:$0xff]
    %v104 = vld [vmem:[#allocation2 + $0xf8] sm:$0xff]
    %105 = vmatpush.msra.mxu0 %v88
    %106 = vmatpush.msra.mxu0 %v87
    %107 = vmatpush.msra.mxu0 %v86
    %108 = vmatpush.msra.mxu0 %v85
    %109 = vmatpush.msra.mxu0 %v84
    %110 = vmatpush.msra.mxu0 %v83
    %111 = vmatpush.msra.mxu0 %v82
    %112 = vmatpush.msra.mxu0 %v81
    %113 = vmatpush.msra.mxu0 %v80
    %114 = vmatpush.msra.mxu0 %v79
    %115 = vmatpush.msra.mxu0 %v78
    %116 = vmatpush.msra.mxu0 %v77
    %117 = vmatpush.msra.mxu0 %v76
    %118 = vmatpush.msra.mxu0 %v75
    %119 = vmatpush.msra.mxu0 %v74
    %120 = vmatpush.msra.mxu0 %v73
    %121 = vmatmul.f32.gmra.mxu0 %v65
    %v122 = vpop.f32.mrf.mxu0
    %v123 = vadd.f32 0.0, %v122
    %124 = vmatmul.f32.gmra.mxu0 %v67
    %v125 = vpop.f32.mrf.mxu0
    %v126 = vadd.f32 0.0, %v125
    %127 = vmatmul.f32.gmra.mxu0 %v69
    %v128 = vpop.f32.mrf.mxu0
    %v129 = vadd.f32 0.0, %v128
    %130 = vmatmul.f32.gmra.mxu0 %v71
    %v131 = vpop.f32.mrf.mxu0
    %v132 = vadd.f32 0.0, %v131
    %133 = vdwg.mxu0
    %134 = vmatpush.msra.mxu0 %v104
    %135 = vmatpush.msra.mxu0 %v103
    %136 = vmatpush.msra.mxu0 %v102
    %137 = vmatpush.msra.mxu0 %v101
    %138 = vmatpush.msra.mxu0 %v100
    %139 = vmatpush.msra.mxu0 %v99
    %140 = vmatpush.msra.mxu0 %v98
    %141 = vmatpush.msra.mxu0 %v97
    %142 = vmatpush.msra.mxu0 %v96
    %143 = vmatpush.msra.mxu0 %v95
    %144 = vmatpush.msra.mxu0 %v94
    %145 = vmatpush.msra.mxu0 %v93
    %146 = vmatpush.msra.mxu0 %v92
    %147 = vmatpush.msra.mxu0 %v91
    %148 = vmatpush.msra.mxu0 %v90
    %149 = vmatpush.msra.mxu0 %v89
    %150 = vmatmul.f32.gmra.mxu0 %v66
    %v151 = vpop.f32.mrf.mxu0
    %v152 = vadd.f32 %v123, %v151
    %153 = vmatmul.f32.gmra.mxu0 %v68
    %v154 = vpop.f32.mrf.mxu0
    %v155 = vadd.f32 %v126, %v154
    %156 = vmatmul.f32.gmra.mxu0 %v70
    %v157 = vpop.f32.mrf.mxu0
    %v158 = vadd.f32 %v129, %v157
    %159 = vmatmul.f32.gmra.mxu0 %v72
    %v160 = vpop.f32.mrf.mxu0
    %v161 = vadd.f32 %v132, %v160
    %162 = vdwg.mxu0
    %v163 = vld [vmem:[#allocation2 + $0x100] sm:$0xff]
    %v164 = vld [vmem:[#allocation2 + $0x108] sm:$0xff]
    %v165 = vld [vmem:[#allocation2 + $0x110] sm:$0xff]
    %v166 = vld [vmem:[#allocation2 + $0x118] sm:$0xff]
    %v167 = vld [vmem:[#allocation2 + $0x140] sm:$0xff]
    %v168 = vld [vmem:[#allocation2 + $0x148] sm:$0xff]
    %v169 = vld [vmem:[#allocation2 + $0x150] sm:$0xff]
    %v170 = vld [vmem:[#allocation2 + $0x158] sm:$0xff]
    %v171 = vld [vmem:[#allocation2 + $0x2f0] sm:$0x1]
    %v172 = vld [vmem:[#allocation2 + $0x300] sm:$0x1]
    %v173 = vperm.slane %v171, 0
    %vm174 = vcmask 261120
    %v176 = vsel %vm174, %v152, 0
    %v179 = vsel %vm174, %v155, 0
    %v182 = vsel %vm174, %v158, 0
    %v185 = vsel %vm174, %v161, 0
    %187 = vmatpush.msra.mxu0 0.0
    %188 = vmatpush.msra.mxu0 0.0
    %189 = vmatpush.msra.mxu0 0.0
    %190 = vmatpush.msra.mxu0 0.0
    %191 = vmatpush.msra.mxu0 0.0
    %192 = vmatpush.msra.mxu0 0.0
    %193 = vmatpush.msra.mxu0 0.0
    %194 = vmatpush.msra.mxu0 0.0
    %195 = vmatpush.msra.mxu0 0.0
    %196 = vmatpush.msra.mxu0 0.0
    %197 = vmatpush.msra.mxu0 0.0
    %198 = vmatpush.msra.mxu0 0.0
    %199 = vmatpush.msra.mxu0 %v166
    %200 = vmatpush.msra.mxu0 %v165
    %201 = vmatpush.msra.mxu0 %v164
    %202 = vmatpush.msra.mxu0 %v163
    %203 = vmatmul.f32.gmra.mxu0 %v176
    %v204 = vpop.f32.mrf.mxu0
    %v205 = vadd.f32 %v173, %v204
    %206 = vmatmul.f32.gmra.mxu0 %v179
    %v207 = vpop.f32.mrf.mxu0
    %v208 = vadd.f32 %v173, %v207
    %209 = vmatmul.f32.gmra.mxu0 %v182
    %v210 = vpop.f32.mrf.mxu0
    %v211 = vadd.f32 %v173, %v210
    %212 = vmatmul.f32.gmra.mxu0 %v185
    %v213 = vpop.f32.mrf.mxu0
    %v214 = vadd.f32 %v173, %v213
    %215 = vdwg.mxu0
    %v216 = vperm.slane %v172, 0
    %v218 = vsel %vm174, 0.0, 0
    %220 = vmatpush.msra.mxu0 0.0
    %221 = vmatpush.msra.mxu0 0.0
    %222 = vmatpush.msra.mxu0 0.0
    %223 = vmatpush.msra.mxu0 0.0
    %224 = vmatpush.msra.mxu0 0.0
    %225 = vmatpush.msra.mxu0 0.0
    %226 = vmatpush.msra.mxu0 0.0
    %227 = vmatpush.msra.mxu0 0.0
    %228 = vmatpush.msra.mxu0 0.0
    %229 = vmatpush.msra.mxu0 0.0
    %230 = vmatpush.msra.mxu0 0.0
    %231 = vmatpush.msra.mxu0 0.0
    %232 = vmatpush.msra.mxu0 %v170
    %233 = vmatpush.msra.mxu0 %v169
    %234 = vmatpush.msra.mxu0 %v168
    %235 = vmatpush.msra.mxu0 %v167
    %236 = vmatmul.f32.gmra.mxu0 %v218
    %v237 = vpop.f32.mrf.mxu0
    %v238 = vadd.f32 %v216, %v237
    %239 = vdwg.mxu0
    %v240 = vadd.f32 %v205, %v238
    %v241 = vxor.u32 %v240, 2147483648
    %v242 = vmul.f32 %v241, 1.442695
    %v243 = vpow.pop %v242
    %v244 = vadd.f32 %v243, 1.0
    %v245 = vrcp.pop %v244
    %v246 = vmul.f32 %v244, %v245
    %v247 = vsub.f32 1.0, %v246
    %v248 = vmul.f32 %v245, %v247
    %v249 = vadd.f32 %v245, %v248
    %vm250 = vweird.f32 %v244
    %vm251 = vweird.f32 %v245
    %vm252 = vmor %vm250, %vm251
    %v253 = vsel %vm252, %v245, %v249
    %v254 = vand.u32 2147483647, %v244
    %vm255 = vcmp.eq.f32.partialorder %v254, 8.507059e+37
    %v256 = vand.u32 %v244, 2147483648
    %v257 = vor.u32 1.1754944e-38, %v256
    %v258 = vsel %vm255, %v257, %v253
    %v259 = vmul.f32 1.0, %v258
    %261 = vrot.lane.b32.xlu0 %v238, 64
    %v262 = vpop.permute.xlu0 %261
    %v264 = vmul.f32 %v259, %v262
    %266 = vrot.lane.b32.xlu0 %v264, 64
    %v267 = vpop.permute.xlu0 %266
    %v269 = vadd.f32 %v205, %v267
    %v270 = vtanh.pop %v269
    %v271 = vsub.f32 1.0, %v259
    %273 = vrot.lane.b32.xlu0 %v270, 96
    %v274 = vpop.permute.xlu0 %273
    %v276 = vmul.f32 %v271, %v274
    %v277 = vmul.f32 %v259, 0.0
    %v278 = vadd.f32 %v276, %v277
    %280 = vrot.lane.b32.xlu0 %v278, 96
    %v281 = vpop.permute.xlu0 %280
    %v282 = vsel %vm174, %v281, 0
    %284 = vmatpush.msra.mxu0 0.0
    %285 = vmatpush.msra.mxu0 0.0
    %286 = vmatpush.msra.mxu0 0.0
    %287 = vmatpush.msra.mxu0 0.0
    %288 = vmatpush.msra.mxu0 0.0
    %289 = vmatpush.msra.mxu0 0.0
    %290 = vmatpush.msra.mxu0 0.0
    %291 = vmatpush.msra.mxu0 0.0
    %292 = vmatpush.msra.mxu0 0.0
    %293 = vmatpush.msra.mxu0 0.0
    %294 = vmatpush.msra.mxu0 0.0
    %295 = vmatpush.msra.mxu0 0.0
    %296 = vmatpush.msra.mxu0 %v170
    %297 = vmatpush.msra.mxu0 %v169
    %298 = vmatpush.msra.mxu0 %v168
    %299 = vmatpush.msra.mxu0 %v167
    %300 = vmatmul.f32.gmra.mxu0 %v282
    %v301 = vpop.f32.mrf.mxu0
    %v302 = vadd.f32 %v216, %v301
    %303 = vdwg.mxu0
    %v305 = vrot.slane %v302, 4
    %v307 = vadd.f32 %v205, %v305
    %v308 = vxor.u32 %v307, 2147483648
    %v309 = vmul.f32 %v308, 1.442695
    %v310 = vpow.pop %v309
    %v311 = vadd.f32 %v310, 1.0
    %v312 = vrcp.pop %v311
    %v313 = vmul.f32 %v311, %v312
    %v314 = vsub.f32 1.0, %v313
    %v315 = vmul.f32 %v312, %v314
    %v316 = vadd.f32 %v312, %v315
    %vm317 = vweird.f32 %v311
    %vm318 = vweird.f32 %v312
    %vm319 = vmor %vm317, %vm318
    %v320 = vsel %vm319, %v312, %v316
    %v321 = vand.u32 2147483647, %v311
    %vm322 = vcmp.eq.f32.partialorder %v321, 8.507059e+37
    %v323 = vand.u32 %v311, 2147483648
    %v324 = vor.u32 1.1754944e-38, %v323
    %v325 = vsel %vm322, %v324, %v320
    %v326 = vmul.f32 1.0, %v325
    %327 = vrot.lane.b32.xlu0 %v305, 64
    %v328 = vpop.permute.xlu0 %327
    %v330 = vmul.f32 %v326, %v328
    %332 = vrot.lane.b32.xlu0 %v330, 64
    %v333 = vpop.permute.xlu0 %332
    %v335 = vadd.f32 %v205, %v333
    %v336 = vtanh.pop %v335
    %v337 = vsub.f32 1.0, %v326
    %339 = vrot.lane.b32.xlu0 %v336, 96
    %v340 = vpop.permute.xlu0 %339
    %v342 = vmul.f32 %v337, %v340
    %v343 = vrot.slane %v278, 4
    %v345 = vmul.f32 %v326, %v343
    %v346 = vadd.f32 %v342, %v345
    %v348 = vrot.slane %v346, 4
    %349 = vrot.lane.b32.xlu0 %v348, 96
    %v350 = vpop.permute.xlu0 %349
    %v351 = vsel %vm174, %v350, 0
    %353 = vmatpush.msra.mxu0 0.0
    %354 = vmatpush.msra.mxu0 0.0
    %355 = vmatpush.msra.mxu0 0.0
    %356 = vmatpush.msra.mxu0 0.0
    %357 = vmatpush.msra.mxu0 0.0
    %358 = vmatpush.msra.mxu0 0.0
    %359 = vmatpush.msra.mxu0 0.0
    %360 = vmatpush.msra.mxu0 0.0
    %361 = vmatpush.msra.mxu0 0.0
    %362 = vmatpush.msra.mxu0 0.0
    %363 = vmatpush.msra.mxu0 0.0
    %364 = vmatpush.msra.mxu0 0.0
    %365 = vmatpush.msra.mxu0 %v170
    %366 = vmatpush.msra.mxu0 %v169
    %367 = vmatpush.msra.mxu0 %v168
    %368 = vmatpush.msra.mxu0 %v167
    %369 = vmatmul.f32.gmra.mxu0 %v351
    %v370 = vpop.f32.mrf.mxu0
    %v371 = vadd.f32 %v216, %v370
    %372 = vdwg.mxu0
    %v373 = vadd.f32 %v208, %v371
    %v374 = vxor.u32 %v373, 2147483648
    %v375 = vmul.f32 %v374, 1.442695
    %v376 = vpow.pop %v375
    %v377 = vadd.f32 %v376, 1.0
    %v378 = vrcp.pop %v377
    %v379 = vmul.f32 %v377, %v378
    %v380 = vsub.f32 1.0, %v379
    %v381 = vmul.f32 %v378, %v380
    %v382 = vadd.f32 %v378, %v381
    %vm383 = vweird.f32 %v377
    %vm384 = vweird.f32 %v378
    %vm385 = vmor %vm383, %vm384
    %v386 = vsel %vm385, %v378, %v382
    %v387 = vand.u32 2147483647, %v377
    %vm388 = vcmp.eq.f32.partialorder %v387, 8.507059e+37
    %v389 = vand.u32 %v377, 2147483648
    %v390 = vor.u32 1.1754944e-38, %v389
    %v391 = vsel %vm388, %v390, %v386
    %v392 = vmul.f32 1.0, %v391
    %394 = vrot.lane.b32.xlu0 %v371, 64
    %v395 = vpop.permute.xlu0 %394
    %v397 = vmul.f32 %v392, %v395
    %399 = vrot.lane.b32.xlu0 %v397, 64
    %v400 = vpop.permute.xlu0 %399
    %v402 = vadd.f32 %v208, %v400
    %v403 = vtanh.pop %v402
    %v404 = vsub.f32 1.0, %v392
    %406 = vrot.lane.b32.xlu0 %v403, 96
    %v407 = vpop.permute.xlu0 %406
    %v409 = vmul.f32 %v404, %v407
    %v411 = vmul.f32 %v392, %v348
    %v412 = vadd.f32 %v409, %v411
    %414 = vrot.lane.b32.xlu0 %v412, 96
    %v415 = vpop.permute.xlu0 %414
    %v416 = vsel %vm174, %v415, 0
    %418 = vmatpush.msra.mxu0 0.0
    %419 = vmatpush.msra.mxu0 0.0
    %420 = vmatpush.msra.mxu0 0.0
    %421 = vmatpush.msra.mxu0 0.0
    %422 = vmatpush.msra.mxu0 0.0
    %423 = vmatpush.msra.mxu0 0.0
    %424 = vmatpush.msra.mxu0 0.0
    %425 = vmatpush.msra.mxu0 0.0
    %426 = vmatpush.msra.mxu0 0.0
    %427 = vmatpush.msra.mxu0 0.0
    %428 = vmatpush.msra.mxu0 0.0
    %429 = vmatpush.msra.mxu0 0.0
    %430 = vmatpush.msra.mxu0 %v170
    %431 = vmatpush.msra.mxu0 %v169
    %432 = vmatpush.msra.mxu0 %v168
    %433 = vmatpush.msra.mxu0 %v167
    %434 = vmatmul.f32.gmra.mxu0 %v416
    %v435 = vpop.f32.mrf.mxu0
    %v436 = vadd.f32 %v216, %v435
    %437 = vdwg.mxu0
    %v439 = vrot.slane %v436, 4
    %v441 = vadd.f32 %v208, %v439
    %v442 = vxor.u32 %v441, 2147483648
    %v443 = vmul.f32 %v442, 1.442695
    %v444 = vpow.pop %v443
    %v445 = vadd.f32 %v444, 1.0
    %v446 = vrcp.pop %v445
    %v447 = vmul.f32 %v445, %v446
    %v448 = vsub.f32 1.0, %v447
    %v449 = vmul.f32 %v446, %v448
    %v450 = vadd.f32 %v446, %v449
    %vm451 = vweird.f32 %v445
    %vm452 = vweird.f32 %v446
    %vm453 = vmor %vm451, %vm452
    %v454 = vsel %vm453, %v446, %v450
    %v455 = vand.u32 2147483647, %v445
    %vm456 = vcmp.eq.f32.partialorder %v455, 8.507059e+37
    %v457 = vand.u32 %v445, 2147483648
    %v458 = vor.u32 1.1754944e-38, %v457
    %v459 = vsel %vm456, %v458, %v454
    %v460 = vmul.f32 1.0, %v459
    %461 = vrot.lane.b32.xlu0 %v439, 64
    %v462 = vpop.permute.xlu0 %461
    %v464 = vmul.f32 %v460, %v462
    %466 = vrot.lane.b32.xlu0 %v464, 64
    %v467 = vpop.permute.xlu0 %466
    %v469 = vadd.f32 %v208, %v467
    %v470 = vtanh.pop %v469
    %v471 = vsub.f32 1.0, %v460
    %473 = vrot.lane.b32.xlu0 %v470, 96
    %v474 = vpop.permute.xlu0 %473
    %v476 = vmul.f32 %v471, %v474
    %v477 = vrot.slane %v412, 4
    %v479 = vmul.f32 %v460, %v477
    %v480 = vadd.f32 %v476, %v479
    %v482 = vrot.slane %v480, 4
    %483 = vrot.lane.b32.xlu0 %v482, 96
    %v484 = vpop.permute.xlu0 %483
    %v485 = vsel %vm174, %v484, 0
    %487 = vmatpush.msra.mxu0 0.0
    %488 = vmatpush.msra.mxu0 0.0
    %489 = vmatpush.msra.mxu0 0.0
    %490 = vmatpush.msra.mxu0 0.0
    %491 = vmatpush.msra.mxu0 0.0
    %492 = vmatpush.msra.mxu0 0.0
    %493 = vmatpush.msra.mxu0 0.0
    %494 = vmatpush.msra.mxu0 0.0
    %495 = vmatpush.msra.mxu0 0.0
    %496 = vmatpush.msra.mxu0 0.0
    %497 = vmatpush.msra.mxu0 0.0
    %498 = vmatpush.msra.mxu0 0.0
    %499 = vmatpush.msra.mxu0 %v170
    %500 = vmatpush.msra.mxu0 %v169
    %501 = vmatpush.msra.mxu0 %v168
    %502 = vmatpush.msra.mxu0 %v167
    %503 = vmatmul.f32.gmra.mxu0 %v485
    %v504 = vpop.f32.mrf.mxu0
    %v505 = vadd.f32 %v216, %v504
    %506 = vdwg.mxu0
    %v507 = vadd.f32 %v211, %v505
    %v508 = vxor.u32 %v507, 2147483648
    %v509 = vmul.f32 %v508, 1.442695
    %v510 = vpow.pop %v509
    %v511 = vadd.f32 %v510, 1.0
    %v512 = vrcp.pop %v511
    %v513 = vmul.f32 %v511, %v512
    %v514 = vsub.f32 1.0, %v513
    %v515 = vmul.f32 %v512, %v514
    %v516 = vadd.f32 %v512, %v515
    %vm517 = vweird.f32 %v511
    %vm518 = vweird.f32 %v512
    %vm519 = vmor %vm517, %vm518
    %v520 = vsel %vm519, %v512, %v516
    %v521 = vand.u32 2147483647, %v511
    %vm522 = vcmp.eq.f32.partialorder %v521, 8.507059e+37
    %v523 = vand.u32 %v511, 2147483648
    %v524 = vor.u32 1.1754944e-38, %v523
    %v525 = vsel %vm522, %v524, %v520
    %v526 = vmul.f32 1.0, %v525
    %528 = vrot.lane.b32.xlu0 %v505, 64
    %v529 = vpop.permute.xlu0 %528
    %v531 = vmul.f32 %v526, %v529
    %533 = vrot.lane.b32.xlu0 %v531, 64
    %v534 = vpop.permute.xlu0 %533
    %v536 = vadd.f32 %v211, %v534
    %v537 = vtanh.pop %v536
    %v538 = vsub.f32 1.0, %v526
    %540 = vrot.lane.b32.xlu0 %v537, 96
    %v541 = vpop.permute.xlu0 %540
    %v543 = vmul.f32 %v538, %v541
    %v545 = vmul.f32 %v526, %v482
    %v546 = vadd.f32 %v543, %v545
    %548 = vrot.lane.b32.xlu0 %v546, 96
    %v549 = vpop.permute.xlu0 %548
    %v550 = vsel %vm174, %v549, 0
    %552 = vmatpush.msra.mxu0 0.0
    %553 = vmatpush.msra.mxu0 0.0
    %554 = vmatpush.msra.mxu0 0.0
    %555 = vmatpush.msra.mxu0 0.0
    %556 = vmatpush.msra.mxu0 0.0
    %557 = vmatpush.msra.mxu0 0.0
    %558 = vmatpush.msra.mxu0 0.0
    %559 = vmatpush.msra.mxu0 0.0
    %560 = vmatpush.msra.mxu0 0.0
    %561 = vmatpush.msra.mxu0 0.0
    %562 = vmatpush.msra.mxu0 0.0
    %563 = vmatpush.msra.mxu0 0.0
    %564 = vmatpush.msra.mxu0 %v170
    %565 = vmatpush.msra.mxu0 %v169
    %566 = vmatpush.msra.mxu0 %v168
    %567 = vmatpush.msra.mxu0 %v167
    %568 = vmatmul.f32.gmra.mxu0 %v550
    %v569 = vpop.f32.mrf.mxu0
    %v570 = vadd.f32 %v216, %v569
    %571 = vdwg.mxu0
    %v573 = vrot.slane %v570, 4
    %v575 = vadd.f32 %v211, %v573
    %v576 = vxor.u32 %v575, 2147483648
    %v577 = vmul.f32 %v576, 1.442695
    %v578 = vpow.pop %v577
    %v579 = vadd.f32 %v578, 1.0
    %v580 = vrcp.pop %v579
    %v581 = vmul.f32 %v579, %v580
    %v582 = vsub.f32 1.0, %v581
    %v583 = vmul.f32 %v580, %v582
    %v584 = vadd.f32 %v580, %v583
    %vm585 = vweird.f32 %v579
    %vm586 = vweird.f32 %v580
    %vm587 = vmor %vm585, %vm586
    %v588 = vsel %vm587, %v580, %v584
    %v589 = vand.u32 2147483647, %v579
    %vm590 = vcmp.eq.f32.partialorder %v589, 8.507059e+37
    %v591 = vand.u32 %v579, 2147483648
    %v592 = vor.u32 1.1754944e-38, %v591
    %v593 = vsel %vm590, %v592, %v588
    %v594 = vmul.f32 1.0, %v593
    %595 = vrot.lane.b32.xlu0 %v573, 64
    %v596 = vpop.permute.xlu0 %595
    %v598 = vmul.f32 %v594, %v596
    %600 = vrot.lane.b32.xlu0 %v598, 64
    %v601 = vpop.permute.xlu0 %600
    %v603 = vadd.f32 %v211, %v601
    %v604 = vtanh.pop %v603
    %v605 = vsub.f32 1.0, %v594
    %607 = vrot.lane.b32.xlu0 %v604, 96
    %v608 = vpop.permute.xlu0 %607
    %v610 = vmul.f32 %v605, %v608
    %v611 = vrot.slane %v546, 4
    %v613 = vmul.f32 %v594, %v611
    %v614 = vadd.f32 %v610, %v613
    %v616 = vrot.slane %v614, 4
    %617 = vrot.lane.b32.xlu0 %v616, 96
    %v618 = vpop.permute.xlu0 %617
    %v619 = vsel %vm174, %v618, 0
    %621 = vmatpush.msra.mxu0 0.0
    %622 = vmatpush.msra.mxu0 0.0
    %623 = vmatpush.msra.mxu0 0.0
    %624 = vmatpush.msra.mxu0 0.0
    %625 = vmatpush.msra.mxu0 0.0
    %626 = vmatpush.msra.mxu0 0.0
    %627 = vmatpush.msra.mxu0 0.0
    %628 = vmatpush.msra.mxu0 0.0
    %629 = vmatpush.msra.mxu0 0.0
    %630 = vmatpush.msra.mxu0 0.0
    %631 = vmatpush.msra.mxu0 0.0
    %632 = vmatpush.msra.mxu0 0.0
    %633 = vmatpush.msra.mxu0 %v170
    %634 = vmatpush.msra.mxu0 %v169
    %635 = vmatpush.msra.mxu0 %v168
    %636 = vmatpush.msra.mxu0 %v167
    %637 = vmatmul.f32.gmra.mxu0 %v619
    %v638 = vpop.f32.mrf.mxu0
    %v639 = vadd.f32 %v216, %v638
    %640 = vdwg.mxu0
    %v641 = vadd.f32 %v214, %v639
    %v642 = vxor.u32 %v641, 2147483648
    %v643 = vmul.f32 %v642, 1.442695
    %v644 = vpow.pop %v643
    %v645 = vadd.f32 %v644, 1.0
    %v646 = vrcp.pop %v645
    %v647 = vmul.f32 %v645, %v646
    %v648 = vsub.f32 1.0, %v647
    %v649 = vmul.f32 %v646, %v648
    %v650 = vadd.f32 %v646, %v649
    %vm651 = vweird.f32 %v645
    %vm652 = vweird.f32 %v646
    %vm653 = vmor %vm651, %vm652
    %v654 = vsel %vm653, %v646, %v650
    %v655 = vand.u32 2147483647, %v645
    %vm656 = vcmp.eq.f32.partialorder %v655, 8.507059e+37
    %v657 = vand.u32 %v645, 2147483648
    %v658 = vor.u32 1.1754944e-38, %v657
    %v659 = vsel %vm656, %v658, %v654
    %v660 = vmul.f32 1.0, %v659
    %662 = vrot.lane.b32.xlu0 %v639, 64
    %v663 = vpop.permute.xlu0 %662
    %v665 = vmul.f32 %v660, %v663
    %667 = vrot.lane.b32.xlu0 %v665, 64
    %v668 = vpop.permute.xlu0 %667
    %v670 = vadd.f32 %v214, %v668
    %v671 = vtanh.pop %v670
    %v672 = vsub.f32 1.0, %v660
    %674 = vrot.lane.b32.xlu0 %v671, 96
    %v675 = vpop.permute.xlu0 %674
    %v677 = vmul.f32 %v672, %v675
    %v679 = vmul.f32 %v660, %v616
    %v680 = vadd.f32 %v677, %v679
    %682 = vrot.lane.b32.xlu0 %v680, 96
    %v683 = vpop.permute.xlu0 %682
    %v684 = vsel %vm174, %v683, 0
    %686 = vmatpush.msra.mxu0 0.0
    %687 = vmatpush.msra.mxu0 0.0
    %688 = vmatpush.msra.mxu0 0.0
    %689 = vmatpush.msra.mxu0 0.0
    %690 = vmatpush.msra.mxu0 0.0
    %691 = vmatpush.msra.mxu0 0.0
    %692 = vmatpush.msra.mxu0 0.0
    %693 = vmatpush.msra.mxu0 0.0
    %694 = vmatpush.msra.mxu0 0.0
    %695 = vmatpush.msra.mxu0 0.0
    %696 = vmatpush.msra.mxu0 0.0
    %697 = vmatpush.msra.mxu0 0.0
    %698 = vmatpush.msra.mxu0 %v170
    %699 = vmatpush.msra.mxu0 %v169
    %700 = vmatpush.msra.mxu0 %v168
    %701 = vmatpush.msra.mxu0 %v167
    %702 = vmatmul.f32.gmra.mxu0 %v684
    %v703 = vpop.f32.mrf.mxu0
    %v704 = vadd.f32 %v216, %v703
    %705 = vdwg.mxu0
    %v707 = vrot.slane %v704, 4
    %v709 = vadd.f32 %v214, %v707
    %v710 = vxor.u32 %v709, 2147483648
    %v711 = vmul.f32 %v710, 1.442695
    %v712 = vpow.pop %v711
    %v713 = vadd.f32 %v712, 1.0
    %v714 = vrcp.pop %v713
    %v715 = vmul.f32 %v713, %v714
    %v716 = vsub.f32 1.0, %v715
    %v717 = vmul.f32 %v714, %v716
    %v718 = vadd.f32 %v714, %v717
    %vm719 = vweird.f32 %v713
    %vm720 = vweird.f32 %v714
    %vm721 = vmor %vm719, %vm720
    %v722 = vsel %vm721, %v714, %v718
    %v723 = vand.u32 2147483647, %v713
    %vm724 = vcmp.eq.f32.partialorder %v723, 8.507059e+37
    %v725 = vand.u32 %v713, 2147483648
    %v726 = vor.u32 1.1754944e-38, %v725
    %v727 = vsel %vm724, %v726, %v722
    %v728 = vmul.f32 1.0, %v727
    %729 = vrot.lane.b32.xlu0 %v707, 64
    %v730 = vpop.permute.xlu0 %729
    %v732 = vmul.f32 %v728, %v730
    %734 = vrot.lane.b32.xlu0 %v732, 64
    %v735 = vpop.permute.xlu0 %734
    %v737 = vadd.f32 %v214, %v735
    %v738 = vtanh.pop %v737
    %v739 = vsub.f32 1.0, %v728
    %741 = vrot.lane.b32.xlu0 %v738, 96
    %v742 = vpop.permute.xlu0 %741
    %v744 = vmul.f32 %v739, %v742
    %v745 = vrot.slane %v680, 4
    %v747 = vmul.f32 %v728, %v745
    %v748 = vadd.f32 %v744, %v747
    %vm749 = vcmask 1043456
    %v750 = vsel %vm749, %v278, %v346
    %v751 = vsel %vm749, %v412, %v480
    %v752 = vsel %vm749, %v546, %v614
    %v753 = vsel %vm749, %v680, %v748
    %v754 = vld [vmem:[#allocation2 + $0x120] sm:$0xff]
    %v755 = vld [vmem:[#allocation2 + $0x128] sm:$0xff]
    %v756 = vld [vmem:[#allocation2 + $0x130] sm:$0xff]
    %v757 = vld [vmem:[#allocation2 + $0x138] sm:$0xff]
    %v758 = vld [vmem:[#allocation2 + $0x160] sm:$0xff]
    %v759 = vld [vmem:[#allocation2 + $0x168] sm:$0xff]
    %v760 = vld [vmem:[#allocation2 + $0x170] sm:$0xff]
    %v761 = vld [vmem:[#allocation2 + $0x178] sm:$0xff]
    %v762 = vld [vmem:[#allocation2 + $0x2f8] sm:$0x1]
    %v763 = vld [vmem:[#allocation2 + $0x308] sm:$0x1]
    %v764 = vperm.slane %v762, 0
    %769 = vrot.lane.b32.xlu0 %v750, 96
    %v770 = vpop.permute.xlu0 %769
    %771 = vrot.lane.b32.xlu0 %v751, 96
    %v772 = vpop.permute.xlu0 %771
    %773 = vrot.lane.b32.xlu0 %v752, 96
    %v774 = vpop.permute.xlu0 %773
    %775 = vrot.lane.b32.xlu0 %v753, 96
    %v776 = vpop.permute.xlu0 %775
    %v777 = vsel %vm174, %v770, 0
    %v779 = vsel %vm174, %v772, 0
    %v781 = vsel %vm174, %v774, 0
    %v783 = vsel %vm174, %v776, 0
    %785 = vmatpush.msra.mxu0 0.0
    %786 = vmatpush.msra.mxu0 0.0
    %787 = vmatpush.msra.mxu0 0.0
    %788 = vmatpush.msra.mxu0 0.0
    %789 = vmatpush.msra.mxu0 0.0
    %790 = vmatpush.msra.mxu0 0.0
    %791 = vmatpush.msra.mxu0 0.0
    %792 = vmatpush.msra.mxu0 0.0
    %793 = vmatpush.msra.mxu0 0.0
    %794 = vmatpush.msra.mxu0 0.0
    %795 = vmatpush.msra.mxu0 0.0
    %796 = vmatpush.msra.mxu0 0.0
    %797 = vmatpush.msra.mxu0 %v757
    %798 = vmatpush.msra.mxu0 %v756
    %799 = vmatpush.msra.mxu0 %v755
    %800 = vmatpush.msra.mxu0 %v754
    %801 = vmatmul.f32.gmra.mxu0 %v777
    %v802 = vpop.f32.mrf.mxu0
    %v803 = vadd.f32 %v764, %v802
    %804 = vmatmul.f32.gmra.mxu0 %v779
    %v805 = vpop.f32.mrf.mxu0
    %v806 = vadd.f32 %v764, %v805
    %807 = vmatmul.f32.gmra.mxu0 %v781
    %v808 = vpop.f32.mrf.mxu0
    %v809 = vadd.f32 %v764, %v808
    %810 = vmatmul.f32.gmra.mxu0 %v783
    %v811 = vpop.f32.mrf.mxu0
    %v812 = vadd.f32 %v764, %v811
    %813 = vdwg.mxu0
    %v814 = vperm.slane %v763, 0
    %815 = vmatpush.msra.mxu0 0.0
    %816 = vmatpush.msra.mxu0 0.0
    %817 = vmatpush.msra.mxu0 0.0
    %818 = vmatpush.msra.mxu0 0.0
    %819 = vmatpush.msra.mxu0 0.0
    %820 = vmatpush.msra.mxu0 0.0
    %821 = vmatpush.msra.mxu0 0.0
    %822 = vmatpush.msra.mxu0 0.0
    %823 = vmatpush.msra.mxu0 0.0
    %824 = vmatpush.msra.mxu0 0.0
    %825 = vmatpush.msra.mxu0 0.0
    %826 = vmatpush.msra.mxu0 0.0
    %827 = vmatpush.msra.mxu0 %v761
    %828 = vmatpush.msra.mxu0 %v760
    %829 = vmatpush.msra.mxu0 %v759
    %830 = vmatpush.msra.mxu0 %v758
    %831 = vmatmul.f32.gmra.mxu0 %v218
    %v832 = vpop.f32.mrf.mxu0
    %v833 = vadd.f32 %v814, %v832
    %834 = vdwg.mxu0
    %v835 = vadd.f32 %v803, %v833
    %v836 = vxor.u32 %v835, 2147483648
    %v837 = vmul.f32 %v836, 1.442695
    %v838 = vpow.pop %v837
    %v839 = vadd.f32 %v838, 1.0
    %v840 = vrcp.pop %v839
    %v841 = vmul.f32 %v839, %v840
    %v842 = vsub.f32 1.0, %v841
    %v843 = vmul.f32 %v840, %v842
    %v844 = vadd.f32 %v840, %v843
    %vm845 = vweird.f32 %v839
    %vm846 = vweird.f32 %v840
    %vm847 = vmor %vm845, %vm846
    %v848 = vsel %vm847, %v840, %v844
    %v849 = vand.u32 2147483647, %v839
    %vm850 = vcmp.eq.f32.partialorder %v849, 8.507059e+37
    %v851 = vand.u32 %v839, 2147483648
    %v852 = vor.u32 1.1754944e-38, %v851
    %v853 = vsel %vm850, %v852, %v848
    %v854 = vmul.f32 1.0, %v853
    %856 = vrot.lane.b32.xlu0 %v833, 64
    %v857 = vpop.permute.xlu0 %856
    %v859 = vmul.f32 %v854, %v857
    %861 = vrot.lane.b32.xlu0 %v859, 64
    %v862 = vpop.permute.xlu0 %861
    %v864 = vadd.f32 %v803, %v862
    %v865 = vtanh.pop %v864
    %v866 = vsub.f32 1.0, %v854
    %868 = vrot.lane.b32.xlu0 %v865, 96
    %v869 = vpop.permute.xlu0 %868
    %v871 = vmul.f32 %v866, %v869
    %v872 = vmul.f32 %v854, 0.0
    %v873 = vadd.f32 %v871, %v872
    %875 = vrot.lane.b32.xlu0 %v873, 96
    %v876 = vpop.permute.xlu0 %875
    %v877 = vsel %vm174, %v876, 0
    %879 = vmatpush.msra.mxu0 0.0
    %880 = vmatpush.msra.mxu0 0.0
    %881 = vmatpush.msra.mxu0 0.0
    %882 = vmatpush.msra.mxu0 0.0
    %883 = vmatpush.msra.mxu0 0.0
    %884 = vmatpush.msra.mxu0 0.0
    %885 = vmatpush.msra.mxu0 0.0
    %886 = vmatpush.msra.mxu0 0.0
    %887 = vmatpush.msra.mxu0 0.0
    %888 = vmatpush.msra.mxu0 0.0
    %889 = vmatpush.msra.mxu0 0.0
    %890 = vmatpush.msra.mxu0 0.0
    %891 = vmatpush.msra.mxu0 %v761
    %892 = vmatpush.msra.mxu0 %v760
    %893 = vmatpush.msra.mxu0 %v759
    %894 = vmatpush.msra.mxu0 %v758
    %895 = vmatmul.f32.gmra.mxu0 %v877
    %v896 = vpop.f32.mrf.mxu0
    %v897 = vadd.f32 %v814, %v896
    %898 = vdwg.mxu0
    %v900 = vrot.slane %v897, 4
    %v902 = vadd.f32 %v803, %v900
    %v903 = vxor.u32 %v902, 2147483648
    %v904 = vmul.f32 %v903, 1.442695
    %v905 = vpow.pop %v904
    %v906 = vadd.f32 %v905, 1.0
    %v907 = vrcp.pop %v906
    %v908 = vmul.f32 %v906, %v907
    %v909 = vsub.f32 1.0, %v908
    %v910 = vmul.f32 %v907, %v909
    %v911 = vadd.f32 %v907, %v910
    %vm912 = vweird.f32 %v906
    %vm913 = vweird.f32 %v907
    %vm914 = vmor %vm912, %vm913
    %v915 = vsel %vm914, %v907, %v911
    %v916 = vand.u32 2147483647, %v906
    %vm917 = vcmp.eq.f32.partialorder %v916, 8.507059e+37
    %v918 = vand.u32 %v906, 2147483648
    %v919 = vor.u32 1.1754944e-38, %v918
    %v920 = vsel %vm917, %v919, %v915
    %v921 = vmul.f32 1.0, %v920
    %922 = vrot.lane.b32.xlu0 %v900, 64
    %v923 = vpop.permute.xlu0 %922
    %v925 = vmul.f32 %v921, %v923
    %927 = vrot.lane.b32.xlu0 %v925, 64
    %v928 = vpop.permute.xlu0 %927
    %v930 = vadd.f32 %v803, %v928
    %v931 = vtanh.pop %v930
    %v932 = vsub.f32 1.0, %v921
    %934 = vrot.lane.b32.xlu0 %v931, 96
    %v935 = vpop.permute.xlu0 %934
    %v937 = vmul.f32 %v932, %v935
    %v938 = vrot.slane %v873, 4
    %v940 = vmul.f32 %v921, %v938
    %v941 = vadd.f32 %v937, %v940
    %v943 = vrot.slane %v941, 4
    %944 = vrot.lane.b32.xlu0 %v943, 96
    %v945 = vpop.permute.xlu0 %944
    %v946 = vsel %vm174, %v945, 0
    %948 = vmatpush.msra.mxu0 0.0
    %949 = vmatpush.msra.mxu0 0.0
    %950 = vmatpush.msra.mxu0 0.0
    %951 = vmatpush.msra.mxu0 0.0
    %952 = vmatpush.msra.mxu0 0.0
    %953 = vmatpush.msra.mxu0 0.0
    %954 = vmatpush.msra.mxu0 0.0
    %955 = vmatpush.msra.mxu0 0.0
    %956 = vmatpush.msra.mxu0 0.0
    %957 = vmatpush.msra.mxu0 0.0
    %958 = vmatpush.msra.mxu0 0.0
    %959 = vmatpush.msra.mxu0 0.0
    %960 = vmatpush.msra.mxu0 %v761
    %961 = vmatpush.msra.mxu0 %v760
    %962 = vmatpush.msra.mxu0 %v759
    %963 = vmatpush.msra.mxu0 %v758
    %964 = vmatmul.f32.gmra.mxu0 %v946
    %v965 = vpop.f32.mrf.mxu0
    %v966 = vadd.f32 %v814, %v965
    %967 = vdwg.mxu0
    %v968 = vadd.f32 %v806, %v966
    %v969 = vxor.u32 %v968, 2147483648
    %v970 = vmul.f32 %v969, 1.442695
    %v971 = vpow.pop %v970
    %v972 = vadd.f32 %v971, 1.0
    %v973 = vrcp.pop %v972
    %v974 = vmul.f32 %v972, %v973
    %v975 = vsub.f32 1.0, %v974
    %v976 = vmul.f32 %v973, %v975
    %v977 = vadd.f32 %v973, %v976
    %vm978 = vweird.f32 %v972
    %vm979 = vweird.f32 %v973
    %vm980 = vmor %vm978, %vm979
    %v981 = vsel %vm980, %v973, %v977
    %v982 = vand.u32 2147483647, %v972
    %vm983 = vcmp.eq.f32.partialorder %v982, 8.507059e+37
    %v984 = vand.u32 %v972, 2147483648
    %v985 = vor.u32 1.1754944e-38, %v984
    %v986 = vsel %vm983, %v985, %v981
    %v987 = vmul.f32 1.0, %v986
    %989 = vrot.lane.b32.xlu0 %v966, 64
    %v990 = vpop.permute.xlu0 %989
    %v992 = vmul.f32 %v987, %v990
    %994 = vrot.lane.b32.xlu0 %v992, 64
    %v995 = vpop.permute.xlu0 %994
    %v997 = vadd.f32 %v806, %v995
    %v998 = vtanh.pop %v997
    %v999 = vsub.f32 1.0, %v987
    %1001 = vrot.lane.b32.xlu0 %v998, 96
    %v1002 = vpop.permute.xlu0 %1001
    %v1004 = vmul.f32 %v999, %v1002
    %v1006 = vmul.f32 %v987, %v943
    %v1007 = vadd.f32 %v1004, %v1006
    %1009 = vrot.lane.b32.xlu0 %v1007, 96
    %v1010 = vpop.permute.xlu0 %1009
    %v1011 = vsel %vm174, %v1010, 0
    %1013 = vmatpush.msra.mxu0 0.0
    %1014 = vmatpush.msra.mxu0 0.0
    %1015 = vmatpush.msra.mxu0 0.0
    %1016 = vmatpush.msra.mxu0 0.0
    %1017 = vmatpush.msra.mxu0 0.0
    %1018 = vmatpush.msra.mxu0 0.0
    %1019 = vmatpush.msra.mxu0 0.0
    %1020 = vmatpush.msra.mxu0 0.0
    %1021 = vmatpush.msra.mxu0 0.0
    %1022 = vmatpush.msra.mxu0 0.0
    %1023 = vmatpush.msra.mxu0 0.0
    %1024 = vmatpush.msra.mxu0 0.0
    %1025 = vmatpush.msra.mxu0 %v761
    %1026 = vmatpush.msra.mxu0 %v760
    %1027 = vmatpush.msra.mxu0 %v759
    %1028 = vmatpush.msra.mxu0 %v758
    %1029 = vmatmul.f32.gmra.mxu0 %v1011
    %v1030 = vpop.f32.mrf.mxu0
    %v1031 = vadd.f32 %v814, %v1030
    %1032 = vdwg.mxu0
    %v1034 = vrot.slane %v1031, 4
    %v1036 = vadd.f32 %v806, %v1034
    %v1037 = vxor.u32 %v1036, 2147483648
    %v1038 = vmul.f32 %v1037, 1.442695
    %v1039 = vpow.pop %v1038
    %v1040 = vadd.f32 %v1039, 1.0
    %v1041 = vrcp.pop %v1040
    %v1042 = vmul.f32 %v1040, %v1041
    %v1043 = vsub.f32 1.0, %v1042
    %v1044 = vmul.f32 %v1041, %v1043
    %v1045 = vadd.f32 %v1041, %v1044
    %vm1046 = vweird.f32 %v1040
    %vm1047 = vweird.f32 %v1041
    %vm1048 = vmor %vm1046, %vm1047
    %v1049 = vsel %vm1048, %v1041, %v1045
    %v1050 = vand.u32 2147483647, %v1040
    %vm1051 = vcmp.eq.f32.partialorder %v1050, 8.507059e+37
    %v1052 = vand.u32 %v1040, 2147483648
    %v1053 = vor.u32 1.1754944e-38, %v1052
    %v1054 = vsel %vm1051, %v1053, %v1049
    %v1055 = vmul.f32 1.0, %v1054
    %1056 = vrot.lane.b32.xlu0 %v1034, 64
    %v1057 = vpop.permute.xlu0 %1056
    %v1059 = vmul.f32 %v1055, %v1057
    %1061 = vrot.lane.b32.xlu0 %v1059, 64
    %v1062 = vpop.permute.xlu0 %1061
    %v1064 = vadd.f32 %v806, %v1062
    %v1065 = vtanh.pop %v1064
    %v1066 = vsub.f32 1.0, %v1055
    %1068 = vrot.lane.b32.xlu0 %v1065, 96
    %v1069 = vpop.permute.xlu0 %1068
    %v1071 = vmul.f32 %v1066, %v1069
    %v1072 = vrot.slane %v1007, 4
    %v1074 = vmul.f32 %v1055, %v1072
    %v1075 = vadd.f32 %v1071, %v1074
    %v1077 = vrot.slane %v1075, 4
    %1078 = vrot.lane.b32.xlu0 %v1077, 96
    %v1079 = vpop.permute.xlu0 %1078
    %v1080 = vsel %vm174, %v1079, 0
    %1082 = vmatpush.msra.mxu0 0.0
    %1083 = vmatpush.msra.mxu0 0.0
    %1084 = vmatpush.msra.mxu0 0.0
    %1085 = vmatpush.msra.mxu0 0.0
    %1086 = vmatpush.msra.mxu0 0.0
    %1087 = vmatpush.msra.mxu0 0.0
    %1088 = vmatpush.msra.mxu0 0.0
    %1089 = vmatpush.msra.mxu0 0.0
    %1090 = vmatpush.msra.mxu0 0.0
    %1091 = vmatpush.msra.mxu0 0.0
    %1092 = vmatpush.msra.mxu0 0.0
    %1093 = vmatpush.msra.mxu0 0.0
    %1094 = vmatpush.msra.mxu0 %v761
    %1095 = vmatpush.msra.mxu0 %v760
    %1096 = vmatpush.msra.mxu0 %v759
    %1097 = vmatpush.msra.mxu0 %v758
    %1098 = vmatmul.f32.gmra.mxu0 %v1080
    %v1099 = vpop.f32.mrf.mxu0
    %v1100 = vadd.f32 %v814, %v1099
    %1101 = vdwg.mxu0
    %v1102 = vadd.f32 %v809, %v1100
    %v1103 = vxor.u32 %v1102, 2147483648
    %v1104 = vmul.f32 %v1103, 1.442695
    %v1105 = vpow.pop %v1104
    %v1106 = vadd.f32 %v1105, 1.0
    %v1107 = vrcp.pop %v1106
    %v1108 = vmul.f32 %v1106, %v1107
    %v1109 = vsub.f32 1.0, %v1108
    %v1110 = vmul.f32 %v1107, %v1109
    %v1111 = vadd.f32 %v1107, %v1110
    %vm1112 = vweird.f32 %v1106
    %vm1113 = vweird.f32 %v1107
    %vm1114 = vmor %vm1112, %vm1113
    %v1115 = vsel %vm1114, %v1107, %v1111
    %v1116 = vand.u32 2147483647, %v1106
    %vm1117 = vcmp.eq.f32.partialorder %v1116, 8.507059e+37
    %v1118 = vand.u32 %v1106, 2147483648
    %v1119 = vor.u32 1.1754944e-38, %v1118
    %v1120 = vsel %vm1117, %v1119, %v1115
    %v1121 = vmul.f32 1.0, %v1120
    %1123 = vrot.lane.b32.xlu0 %v1100, 64
    %v1124 = vpop.permute.xlu0 %1123
    %v1126 = vmul.f32 %v1121, %v1124
    %1128 = vrot.lane.b32.xlu0 %v1126, 64
    %v1129 = vpop.permute.xlu0 %1128
    %v1131 = vadd.f32 %v809, %v1129
    %v1132 = vtanh.pop %v1131
    %v1133 = vsub.f32 1.0, %v1121
    %1135 = vrot.lane.b32.xlu0 %v1132, 96
    %v1136 = vpop.permute.xlu0 %1135
    %v1138 = vmul.f32 %v1133, %v1136
    %v1140 = vmul.f32 %v1121, %v1077
    %v1141 = vadd.f32 %v1138, %v1140
    %1143 = vrot.lane.b32.xlu0 %v1141, 96
    %v1144 = vpop.permute.xlu0 %1143
    %v1145 = vsel %vm174, %v1144, 0
    %1147 = vmatpush.msra.mxu0 0.0
    %1148 = vmatpush.msra.mxu0 0.0
    %1149 = vmatpush.msra.mxu0 0.0
    %1150 = vmatpush.msra.mxu0 0.0
    %1151 = vmatpush.msra.mxu0 0.0
    %1152 = vmatpush.msra.mxu0 0.0
    %1153 = vmatpush.msra.mxu0 0.0
    %1154 = vmatpush.msra.mxu0 0.0
    %1155 = vmatpush.msra.mxu0 0.0
    %1156 = vmatpush.msra.mxu0 0.0
    %1157 = vmatpush.msra.mxu0 0.0
    %1158 = vmatpush.msra.mxu0 0.0
    %1159 = vmatpush.msra.mxu0 %v761
    %1160 = vmatpush.msra.mxu0 %v760
    %1161 = vmatpush.msra.mxu0 %v759
    %1162 = vmatpush.msra.mxu0 %v758
    %1163 = vmatmul.f32.gmra.mxu0 %v1145
    %v1164 = vpop.f32.mrf.mxu0
    %v1165 = vadd.f32 %v814, %v1164
    %1166 = vdwg.mxu0
    %v1168 = vrot.slane %v1165, 4
    %v1170 = vadd.f32 %v809, %v1168
    %v1171 = vxor.u32 %v1170, 2147483648
    %v1172 = vmul.f32 %v1171, 1.442695
    %v1173 = vpow.pop %v1172
    %v1174 = vadd.f32 %v1173, 1.0
    %v1175 = vrcp.pop %v1174
    %v1176 = vmul.f32 %v1174, %v1175
    %v1177 = vsub.f32 1.0, %v1176
    %v1178 = vmul.f32 %v1175, %v1177
    %v1179 = vadd.f32 %v1175, %v1178
    %vm1180 = vweird.f32 %v1174
    %vm1181 = vweird.f32 %v1175
    %vm1182 = vmor %vm1180, %vm1181
    %v1183 = vsel %vm1182, %v1175, %v1179
    %v1184 = vand.u32 2147483647, %v1174
    %vm1185 = vcmp.eq.f32.partialorder %v1184, 8.507059e+37
    %v1186 = vand.u32 %v1174, 2147483648
    %v1187 = vor.u32 1.1754944e-38, %v1186
    %v1188 = vsel %vm1185, %v1187, %v1183
    %v1189 = vmul.f32 1.0, %v1188
    %1190 = vrot.lane.b32.xlu0 %v1168, 64
    %v1191 = vpop.permute.xlu0 %1190
    %v1193 = vmul.f32 %v1189, %v1191
    %1195 = vrot.lane.b32.xlu0 %v1193, 64
    %v1196 = vpop.permute.xlu0 %1195
    %v1198 = vadd.f32 %v809, %v1196
    %v1199 = vtanh.pop %v1198
    %v1200 = vsub.f32 1.0, %v1189
    %1202 = vrot.lane.b32.xlu0 %v1199, 96
    %v1203 = vpop.permute.xlu0 %1202
    %v1205 = vmul.f32 %v1200, %v1203
    %v1206 = vrot.slane %v1141, 4
    %v1208 = vmul.f32 %v1189, %v1206
    %v1209 = vadd.f32 %v1205, %v1208
    %v1211 = vrot.slane %v1209, 4
    %1212 = vrot.lane.b32.xlu0 %v1211, 96
    %v1213 = vpop.permute.xlu0 %1212
    %v1214 = vsel %vm174, %v1213, 0
    %1216 = vmatpush.msra.mxu0 0.0
    %1217 = vmatpush.msra.mxu0 0.0
    %1218 = vmatpush.msra.mxu0 0.0
    %1219 = vmatpush.msra.mxu0 0.0
    %1220 = vmatpush.msra.mxu0 0.0
    %1221 = vmatpush.msra.mxu0 0.0
    %1222 = vmatpush.msra.mxu0 0.0
    %1223 = vmatpush.msra.mxu0 0.0
    %1224 = vmatpush.msra.mxu0 0.0
    %1225 = vmatpush.msra.mxu0 0.0
    %1226 = vmatpush.msra.mxu0 0.0
    %1227 = vmatpush.msra.mxu0 0.0
    %1228 = vmatpush.msra.mxu0 %v761
    %1229 = vmatpush.msra.mxu0 %v760
    %1230 = vmatpush.msra.mxu0 %v759
    %1231 = vmatpush.msra.mxu0 %v758
    %1232 = vmatmul.f32.gmra.mxu0 %v1214
    %v1233 = vpop.f32.mrf.mxu0
    %v1234 = vadd.f32 %v814, %v1233
    %1235 = vdwg.mxu0
    %v1236 = vadd.f32 %v812, %v1234
    %v1237 = vxor.u32 %v1236, 2147483648
    %v1238 = vmul.f32 %v1237, 1.442695
    %v1239 = vpow.pop %v1238
    %v1240 = vadd.f32 %v1239, 1.0
    %v1241 = vrcp.pop %v1240
    %v1242 = vmul.f32 %v1240, %v1241
    %v1243 = vsub.f32 1.0, %v1242
    %v1244 = vmul.f32 %v1241, %v1243
    %v1245 = vadd.f32 %v1241, %v1244
    %vm1246 = vweird.f32 %v1240
    %vm1247 = vweird.f32 %v1241
    %vm1248 = vmor %vm1246, %vm1247
    %v1249 = vsel %vm1248, %v1241, %v1245
    %v1250 = vand.u32 2147483647, %v1240
    %vm1251 = vcmp.eq.f32.partialorder %v1250, 8.507059e+37
    %v1252 = vand.u32 %v1240, 2147483648
    %v1253 = vor.u32 1.1754944e-38, %v1252
    %v1254 = vsel %vm1251, %v1253, %v1249
    %v1255 = vmul.f32 1.0, %v1254
    %1257 = vrot.lane.b32.xlu0 %v1234, 64
    %v1258 = vpop.permute.xlu0 %1257
    %v1260 = vmul.f32 %v1255, %v1258
    %1262 = vrot.lane.b32.xlu0 %v1260, 64
    %v1263 = vpop.permute.xlu0 %1262
    %v1265 = vadd.f32 %v812, %v1263
    %v1266 = vtanh.pop %v1265
    %v1267 = vsub.f32 1.0, %v1255
    %1269 = vrot.lane.b32.xlu0 %v1266, 96
    %v1270 = vpop.permute.xlu0 %1269
    %v1272 = vmul.f32 %v1267, %v1270
    %v1274 = vmul.f32 %v1255, %v1211
    %v1275 = vadd.f32 %v1272, %v1274
    %1277 = vrot.lane.b32.xlu0 %v1275, 96
    %v1278 = vpop.permute.xlu0 %1277
    %v1279 = vsel %vm174, %v1278, 0
    %1281 = vmatpush.msra.mxu0 0.0
    %1282 = vmatpush.msra.mxu0 0.0
    %1283 = vmatpush.msra.mxu0 0.0
    %1284 = vmatpush.msra.mxu0 0.0
    %1285 = vmatpush.msra.mxu0 0.0
    %1286 = vmatpush.msra.mxu0 0.0
    %1287 = vmatpush.msra.mxu0 0.0
    %1288 = vmatpush.msra.mxu0 0.0
    %1289 = vmatpush.msra.mxu0 0.0
    %1290 = vmatpush.msra.mxu0 0.0
    %1291 = vmatpush.msra.mxu0 0.0
    %1292 = vmatpush.msra.mxu0 0.0
    %1293 = vmatpush.msra.mxu0 %v761
    %1294 = vmatpush.msra.mxu0 %v760
    %1295 = vmatpush.msra.mxu0 %v759
    %1296 = vmatpush.msra.mxu0 %v758
    %1297 = vmatmul.f32.gmra.mxu0 %v1279
    %v1298 = vpop.f32.mrf.mxu0
    %v1299 = vadd.f32 %v814, %v1298
    %1300 = vdwg.mxu0
    %v1302 = vrot.slane %v1299, 4
    %v1304 = vadd.f32 %v812, %v1302
    %v1305 = vxor.u32 %v1304, 2147483648
    %v1306 = vmul.f32 %v1305, 1.442695
    %v1307 = vpow.pop %v1306
    %v1308 = vadd.f32 %v1307, 1.0
    %v1309 = vrcp.pop %v1308
    %v1310 = vmul.f32 %v1308, %v1309
    %v1311 = vsub.f32 1.0, %v1310
    %v1312 = vmul.f32 %v1309, %v1311
    %v1313 = vadd.f32 %v1309, %v1312
    %vm1314 = vweird.f32 %v1308
    %vm1315 = vweird.f32 %v1309
    %vm1316 = vmor %vm1314, %vm1315
    %v1317 = vsel %vm1316, %v1309, %v1313
    %v1318 = vand.u32 2147483647, %v1308
    %vm1319 = vcmp.eq.f32.partialorder %v1318, 8.507059e+37
    %v1320 = vand.u32 %v1308, 2147483648
    %v1321 = vor.u32 1.1754944e-38, %v1320
    %v1322 = vsel %vm1319, %v1321, %v1317
    %v1323 = vmul.f32 1.0, %v1322
    %1324 = vrot.lane.b32.xlu0 %v1302, 64
    %v1325 = vpop.permute.xlu0 %1324
    %v1327 = vmul.f32 %v1323, %v1325
    %1329 = vrot.lane.b32.xlu0 %v1327, 64
    %v1330 = vpop.permute.xlu0 %1329
    %v1332 = vadd.f32 %v812, %v1330
    %v1333 = vtanh.pop %v1332
    %v1334 = vsub.f32 1.0, %v1323
    %1336 = vrot.lane.b32.xlu0 %v1333, 96
    %v1337 = vpop.permute.xlu0 %1336
    %v1339 = vmul.f32 %v1334, %v1337
    %v1340 = vrot.slane %v1275, 4
    %v1342 = vmul.f32 %v1323, %v1340
    %v1343 = vadd.f32 %v1339, %v1342
    %1345 = vrot.lane.b32.xlu0 %v1007, 32
    %v1346 = vpop.permute.xlu0 %1345
    %1348 = vrot.lane.b32.xlu0 %v1077, 64
    %v1349 = vpop.permute.xlu0 %1348
    %1352 = vrot.lane.b32.xlu0 %v1275, 32
    %v1353 = vpop.permute.xlu0 %1352
    %v1356 = vrot.slane %v1343, 4
    %1357 = vrot.lane.b32.xlu0 %v1356, 64
    %v1358 = vpop.permute.xlu0 %1357
    %v1360 = vsel %vm174, %v876, %v943
    %vm1361 = vcmask 523264
    %v1362 = vsel %vm1361, %v1360, %v1346
    %vm1363 = vcmask 785408
    %v1364 = vsel %vm1363, %v1362, %v1349
    %v1365 = vsel %vm174, %v1144, %v1211
    %v1366 = vsel %vm1361, %v1365, %v1353
    %v1367 = vsel %vm1363, %v1366, %v1358
    %v1368 = vld [vmem:[%s1] sm:$0xff]
    %1370 = vst [vmem:[#allocation1] ss:$2 sm:$0xff] %v1368
    %v1371 = vld.sshfl [vmem:[#allocation1] sm:$0xff pattern:$0x75316420]
    %v1372 = vld.sshfl [vmem:[#allocation1 + $0x8] sm:$0xff pattern:$0x75316420]
    %v1375 = vmul.f32 %v1364, %v1371
    %v1376 = vmul.f32 %v1367, %v1372
    %v1377 = vld [vmem:[#allocation2 + $0x180] sm:$0xff]
    %v1378 = vld [vmem:[#allocation2 + $0x188] sm:$0xff]
    %v1379 = vld [vmem:[#allocation2 + $0x190] sm:$0xff]
    %v1380 = vld [vmem:[#allocation2 + $0x198] sm:$0xff]
    %v1381 = vld [vmem:[#allocation2 + $0x1a0] sm:$0xff]
    %v1382 = vld [vmem:[#allocation2 + $0x1a8] sm:$0xff]
    %v1383 = vld [vmem:[#allocation2 + $0x1b0] sm:$0xff]
    %v1384 = vld [vmem:[#allocation2 + $0x1b8] sm:$0xff]
    %v1385 = vld [vmem:[#allocation2 + $0x1c0] sm:$0xff]
    %v1386 = vld [vmem:[#allocation2 + $0x1c8] sm:$0xff]
    %v1387 = vld [vmem:[#allocation2 + $0x1d0] sm:$0xff]
    %v1388 = vld [vmem:[#allocation2 + $0x1d8] sm:$0xff]
    %v1389 = vld [vmem:[#allocation2 + $0x1e0] sm:$0xff]
    %v1390 = vld [vmem:[#allocation2 + $0x1e8] sm:$0xff]
    %v1391 = vld [vmem:[#allocation2 + $0x1f0] sm:$0xff]
    %v1392 = vld [vmem:[#allocation2 + $0x1f8] sm:$0xff]
    %v1393 = vld [vmem:[#allocation2 + $0x200] sm:$0xff]
    %v1394 = vld [vmem:[#allocation2 + $0x208] sm:$0xff]
    %v1395 = vld [vmem:[#allocation2 + $0x210] sm:$0xff]
    %v1396 = vld [vmem:[#allocation2 + $0x218] sm:$0xff]
    %v1397 = vld [vmem:[#allocation2 + $0x220] sm:$0xff]
    %v1398 = vld [vmem:[#allocation2 + $0x228] sm:$0xff]
    %v1399 = vld [vmem:[#allocation2 + $0x230] sm:$0xff]
    %v1400 = vld [vmem:[#allocation2 + $0x238] sm:$0xff]
    %v1401 = vld [vmem:[#allocation2 + $0x240] sm:$0xff]
    %v1402 = vld [vmem:[#allocation2 + $0x248] sm:$0xff]
    %v1403 = vld [vmem:[#allocation2 + $0x250] sm:$0xff]
    %v1404 = vld [vmem:[#allocation2 + $0x258] sm:$0xff]
    %v1405 = vld [vmem:[#allocation2 + $0x260] sm:$0xff]
    %v1406 = vld [vmem:[#allocation2 + $0x268] sm:$0xff]
    %v1407 = vld [vmem:[#allocation2 + $0x270] sm:$0xff]
    %v1408 = vld [vmem:[#allocation2 + $0x278] sm:$0xff]
    %1409 = vmatpush.msra.mxu0 %v1392
    %1410 = vmatpush.msra.mxu0 %v1391
    %1411 = vmatpush.msra.mxu0 %v1390
    %1412 = vmatpush.msra.mxu0 %v1389
    %1413 = vmatpush.msra.mxu0 %v1388
    %1414 = vmatpush.msra.mxu0 %v1387
    %1415 = vmatpush.msra.mxu0 %v1386
    %1416 = vmatpush.msra.mxu0 %v1385
    %1417 = vmatpush.msra.mxu0 %v1384
    %1418 = vmatpush.msra.mxu0 %v1383
    %1419 = vmatpush.msra.mxu0 %v1382
    %1420 = vmatpush.msra.mxu0 %v1381
    %1421 = vmatpush.msra.mxu0 %v1380
    %1422 = vmatpush.msra.mxu0 %v1379
    %1423 = vmatpush.msra.mxu0 %v1378
    %1424 = vmatpush.msra.mxu0 %v1377
    %1425 = vmatmul.f32.gmra.mxu0 %v1375
    %v1426 = vpop.f32.mrf.mxu0
    %v1427 = vadd.f32 0.0, %v1426
    %1428 = vdwg.mxu0
    %1429 = vmatpush.msra.mxu0 %v1408
    %1430 = vmatpush.msra.mxu0 %v1407
    %1431 = vmatpush.msra.mxu0 %v1406
    %1432 = vmatpush.msra.mxu0 %v1405
    %1433 = vmatpush.msra.mxu0 %v1404
    %1434 = vmatpush.msra.mxu0 %v1403
    %1435 = vmatpush.msra.mxu0 %v1402
    %1436 = vmatpush.msra.mxu0 %v1401
    %1437 = vmatpush.msra.mxu0 %v1400
    %1438 = vmatpush.msra.mxu0 %v1399
    %1439 = vmatpush.msra.mxu0 %v1398
    %1440 = vmatpush.msra.mxu0 %v1397
    %1441 = vmatpush.msra.mxu0 %v1396
    %1442 = vmatpush.msra.mxu0 %v1395
    %1443 = vmatpush.msra.mxu0 %v1394
    %1444 = vmatpush.msra.mxu0 %v1393
    %1445 = vmatmul.f32.gmra.mxu0 %v1376
    %v1446 = vpop.f32.mrf.mxu0
    %v1447 = vadd.f32 %v1427, %v1446
    %1448 = vdwg.mxu0
    %v1449 = vld [vmem:[#allocation2 + $0x310] sm:$0x1]
    %v1450 = vld [vmem:[#allocation2 + $0x328] sm:$0x1]
    %vm1451 = vcmask 257024
    %v1452 = vsel %vm1451, %v1447, 0.0
    %v1453 = vrot.slane %v1452, 4
    %v1454 = vadd.f32 %v1452, %v1453
    %v1455 = vrot.slane %v1454, 2
    %v1456 = vadd.f32 %v1454, %v1455
    %v1457 = vrot.slane %v1456, 1
    %v1458 = vadd.f32 %v1456, %v1457
    %v1459 = vrcp.pop 4.0
    %v1460 = vmul.f32 4.0, %v1459
    %v1461 = vsub.f32 1.0, %v1460
    %v1462 = vmul.f32 %v1459, %v1461
    %v1463 = vadd.f32 %v1459, %v1462
    %vm1464 = vweird.f32 %v1459
    %v1465 = vsel %vm1464, %v1459, %v1463
    %v1466 = vmul.f32 %v1458, %v1465
    %v1467 = vsub.f32 %v1447, %v1466
    %v1468 = vmul.f32 %v1467, %v1467
    %v1469 = vsel %vm1451, %v1468, 0.0
    %v1470 = vrot.slane %v1469, 4
    %v1471 = vadd.f32 %v1469, %v1470
    %v1472 = vrot.slane %v1471, 2
    %v1473 = vadd.f32 %v1471, %v1472
    %v1474 = vrot.slane %v1473, 1
    %v1475 = vadd.f32 %v1473, %v1474
    %v1476 = vmul.f32 %v1475, %v1465
    %v1477 = vadd.f32 %v1476, 1e-05
    %v1478 = vrsqrt.pop %v1477
    %v1479 = vmul.f32 %v1478, %v1477
    %v1480 = vmul.f32 %v1479, %v1478
    %v1481 = vmul.f32 0.5, %v1480
    %v1482 = vsub.f32 1.5, %v1481
    %v1483 = vmul.f32 %v1478, %v1482
    %vm1484 = vweird.f32 %v1477
    %vm1485 = vweird.f32 %v1478
    %vm1486 = vmor %vm1484, %vm1485
    %v1487 = vsel %vm1486, %v1478, %v1483
    %v1488 = vmul.f32 %v1467, %v1487
    %v1489 = vperm.slane %v1449, 0
    %v1490 = vmul.f32 %v1488, %v1489
    %v1491 = vperm.slane %v1450, 0
    %v1492 = vadd.f32 %v1490, %v1491
    %v1493 = vmax.f32 %v1492, 0.0
    %v1494 = vld [vmem:[#allocation2 + $0x280] sm:$0xff]
    %v1495 = vld [vmem:[#allocation2 + $0x288] sm:$0xff]
    %v1496 = vld [vmem:[#allocation2 + $0x290] sm:$0xff]
    %v1497 = vld [vmem:[#allocation2 + $0x298] sm:$0xff]
    %v1499 = vsel %vm174, %v1493, 0
    %1501 = vmatpush.msra.mxu0 0.0
    %1502 = vmatpush.msra.mxu0 0.0
    %1503 = vmatpush.msra.mxu0 0.0
    %1504 = vmatpush.msra.mxu0 0.0
    %1505 = vmatpush.msra.mxu0 0.0
    %1506 = vmatpush.msra.mxu0 0.0
    %1507 = vmatpush.msra.mxu0 0.0
    %1508 = vmatpush.msra.mxu0 0.0
    %1509 = vmatpush.msra.mxu0 0.0
    %1510 = vmatpush.msra.mxu0 0.0
    %1511 = vmatpush.msra.mxu0 0.0
    %1512 = vmatpush.msra.mxu0 0.0
    %1513 = vmatpush.msra.mxu0 %v1497
    %1514 = vmatpush.msra.mxu0 %v1496
    %1515 = vmatpush.msra.mxu0 %v1495
    %1516 = vmatpush.msra.mxu0 %v1494
    %1517 = vmatmul.f32.gmra.mxu0 %v1499
    %v1518 = vpop.f32.mrf.mxu0
    %v1519 = vadd.f32 0.0, %v1518
    %1520 = vdwg.mxu0
    %v1521 = vld [vmem:[#allocation2 + $0x318] sm:$0x1]
    %v1522 = vld [vmem:[#allocation2 + $0x330] sm:$0x1]
    %v1523 = vsel %vm1451, %v1519, 0.0
    %v1524 = vrot.slane %v1523, 4
    %v1525 = vadd.f32 %v1523, %v1524
    %v1526 = vrot.slane %v1525, 2
    %v1527 = vadd.f32 %v1525, %v1526
    %v1528 = vrot.slane %v1527, 1
    %v1529 = vadd.f32 %v1527, %v1528
    %v1530 = vmul.f32 %v1529, %v1465
    %v1531 = vsub.f32 %v1519, %v1530
    %v1532 = vmul.f32 %v1531, %v1531
    %v1533 = vsel %vm1451, %v1532, 0.0
    %v1534 = vrot.slane %v1533, 4
    %v1535 = vadd.f32 %v1533, %v1534
    %v1536 = vrot.slane %v1535, 2
    %v1537 = vadd.f32 %v1535, %v1536
    %v1538 = vrot.slane %v1537, 1
    %v1539 = vadd.f32 %v1537, %v1538
    %v1540 = vmul.f32 %v1539, %v1465
    %v1541 = vadd.f32 %v1540, 1e-05
    %v1542 = vrsqrt.pop %v1541
    %v1543 = vmul.f32 %v1542, %v1541
    %v1544 = vmul.f32 %v1543, %v1542
    %v1545 = vmul.f32 0.5, %v1544
    %v1546 = vsub.f32 1.5, %v1545
    %v1547 = vmul.f32 %v1542, %v1546
    %vm1548 = vweird.f32 %v1541
    %vm1549 = vweird.f32 %v1542
    %vm1550 = vmor %vm1548, %vm1549
    %v1551 = vsel %vm1550, %v1542, %v1547
    %v1552 = vmul.f32 %v1531, %v1551
    %v1553 = vperm.slane %v1521, 0
    %v1554 = vmul.f32 %v1552, %v1553
    %v1555 = vperm.slane %v1522, 0
    %v1556 = vadd.f32 %v1554, %v1555
    %v1557 = vmax.f32 %v1556, 0.0
    %v1558 = vld [vmem:[#allocation2 + $0x2a0] sm:$0xff]
    %v1559 = vld [vmem:[#allocation2 + $0x2a8] sm:$0xff]
    %v1560 = vld [vmem:[#allocation2 + $0x2b0] sm:$0xff]
    %v1561 = vld [vmem:[#allocation2 + $0x2b8] sm:$0xff]
    %v1563 = vsel %vm174, %v1557, 0
    %1565 = vmatpush.msra.mxu0 0.0
    %1566 = vmatpush.msra.mxu0 0.0
    %1567 = vmatpush.msra.mxu0 0.0
    %1568 = vmatpush.msra.mxu0 0.0
    %1569 = vmatpush.msra.mxu0 0.0
    %1570 = vmatpush.msra.mxu0 0.0
    %1571 = vmatpush.msra.mxu0 0.0
    %1572 = vmatpush.msra.mxu0 0.0
    %1573 = vmatpush.msra.mxu0 0.0
    %1574 = vmatpush.msra.mxu0 0.0
    %1575 = vmatpush.msra.mxu0 0.0
    %1576 = vmatpush.msra.mxu0 0.0
    %1577 = vmatpush.msra.mxu0 %v1561
    %1578 = vmatpush.msra.mxu0 %v1560
    %1579 = vmatpush.msra.mxu0 %v1559
    %1580 = vmatpush.msra.mxu0 %v1558
    %1581 = vmatmul.f32.gmra.mxu0 %v1563
    %v1582 = vpop.f32.mrf.mxu0
    %v1583 = vadd.f32 0.0, %v1582
    %1584 = vdwg.mxu0
    %v1585 = vld [vmem:[#allocation2 + $0x320] sm:$0x1]
    %v1586 = vld [vmem:[#allocation2 + $0x338] sm:$0x1]
    %v1587 = vsel %vm1451, %v1583, 0.0
    %v1588 = vrot.slane %v1587, 4
    %v1589 = vadd.f32 %v1587, %v1588
    %v1590 = vrot.slane %v1589, 2
    %v1591 = vadd.f32 %v1589, %v1590
    %v1592 = vrot.slane %v1591, 1
    %v1593 = vadd.f32 %v1591, %v1592
    %v1594 = vmul.f32 %v1593, %v1465
    %v1595 = vsub.f32 %v1583, %v1594
    %v1596 = vmul.f32 %v1595, %v1595
    %v1597 = vsel %vm1451, %v1596, 0.0
    %v1598 = vrot.slane %v1597, 4
    %v1599 = vadd.f32 %v1597, %v1598
    %v1600 = vrot.slane %v1599, 2
    %v1601 = vadd.f32 %v1599, %v1600
    %v1602 = vrot.slane %v1601, 1
    %v1603 = vadd.f32 %v1601, %v1602
    %v1604 = vmul.f32 %v1603, %v1465
    %v1605 = vadd.f32 %v1604, 1e-05
    %v1606 = vrsqrt.pop %v1605
    %v1607 = vmul.f32 %v1606, %v1605
    %v1608 = vmul.f32 %v1607, %v1606
    %v1609 = vmul.f32 0.5, %v1608
    %v1610 = vsub.f32 1.5, %v1609
    %v1611 = vmul.f32 %v1606, %v1610
    %vm1612 = vweird.f32 %v1605
    %vm1613 = vweird.f32 %v1606
    %vm1614 = vmor %vm1612, %vm1613
    %v1615 = vsel %vm1614, %v1606, %v1611
    %v1616 = vmul.f32 %v1595, %v1615
    %v1617 = vperm.slane %v1585, 0
    %v1618 = vmul.f32 %v1616, %v1617
    %v1619 = vperm.slane %v1586, 0
    %v1620 = vadd.f32 %v1618, %v1619
    %v1621 = vld [vmem:[#allocation2 + $0x2c0] sm:$0xff]
    %v1622 = vld [vmem:[#allocation2 + $0x2c8] sm:$0xff]
    %v1623 = vld [vmem:[#allocation2 + $0x2d0] sm:$0xff]
    %v1624 = vld [vmem:[#allocation2 + $0x2d8] sm:$0xff]
    %v1625 = vld [vmem:[#allocation2 + $0x340] sm:$0x1]
    %v1626 = vperm.slane %v1625, 0
    %v1628 = vsel %vm174, %v1620, 0
    %1630 = vmatpush.msra.mxu0 0.0
    %1631 = vmatpush.msra.mxu0 0.0
    %1632 = vmatpush.msra.mxu0 0.0
    %1633 = vmatpush.msra.mxu0 0.0
    %1634 = vmatpush.msra.mxu0 0.0
    %1635 = vmatpush.msra.mxu0 0.0
    %1636 = vmatpush.msra.mxu0 0.0
    %1637 = vmatpush.msra.mxu0 0.0
    %1638 = vmatpush.msra.mxu0 0.0
    %1639 = vmatpush.msra.mxu0 0.0
    %1640 = vmatpush.msra.mxu0 0.0
    %1641 = vmatpush.msra.mxu0 0.0
    %1642 = vmatpush.msra.mxu0 %v1624
    %1643 = vmatpush.msra.mxu0 %v1623
    %1644 = vmatpush.msra.mxu0 %v1622
    %1645 = vmatpush.msra.mxu0 %v1621
    %1646 = vmatmul.f32.gmra.mxu0 %v1628
    %v1647 = vpop.f32.mrf.mxu0
    %v1648 = vadd.f32 %v1626, %v1647
    %1649 = vdwg.mxu0
    %v1650 = vmax.f32 %v1648, 0.0
    %vm1651 = vcmp.ne.f32.partialorder %v1648, %v1648
    %v1652 = vadd.f32 %v1648, 0.0
    %v1653 = vand.u32 2147483647, %v1648
    %v1654 = vsub.f32 0.0, %v1653
    %v1655 = vmul.f32 %v1654, 1.442695
    %v1656 = vpow.pop %v1655
    %v1657 = vadd.f32 %v1656, 1.0
    %v1658 = vlog2.pop %v1657
    %v1659 = vmul.f32 %v1658, 0.6931472
    %v1660 = vmul.f32 -0.5, %v1656
    %v1661 = vadd.f32 %v1660, 1.0
    %v1662 = vmul.f32 %v1661, %v1656
    %v1663 = vand.u32 2147483647, %v1656
    %vm1664 = vcmp.lt.f32.partialorder %v1663, 0.0004427343
    %v1665 = vsel %vm1664, %v1662, %v1659
    %v1666 = vadd.f32 %v1650, %v1665
    %v1667 = vsel %vm1651, %v1652, %v1666
    %v1668 = vld [vmem:[#allocation2 + $0x2e0] sm:$0xff]
    %v1669 = vld [vmem:[#allocation2 + $0x2e8] sm:$0xff]
    %v1670 = vld [vmem:[#allocation2 + $0x348] sm:$0x1]
    %v1671 = vperm.slane %v1670, 0
    %vm1672 = vcmask 130048
    %v1674 = vsel %vm1672, %v1667, 0
    %1676 = vmatpush.msra.mxu0 0.0
    %1677 = vmatpush.msra.mxu0 0.0
    %1678 = vmatpush.msra.mxu0 0.0
    %1679 = vmatpush.msra.mxu0 0.0
    %1680 = vmatpush.msra.mxu0 0.0
    %1681 = vmatpush.msra.mxu0 0.0
    %1682 = vmatpush.msra.mxu0 0.0
    %1683 = vmatpush.msra.mxu0 0.0
    %1684 = vmatpush.msra.mxu0 0.0
    %1685 = vmatpush.msra.mxu0 0.0
    %1686 = vmatpush.msra.mxu0 0.0
    %1687 = vmatpush.msra.mxu0 0.0
    %1688 = vmatpush.msra.mxu0 0.0
    %1689 = vmatpush.msra.mxu0 0.0
    %1690 = vmatpush.msra.mxu0 %v1669
    %1691 = vmatpush.msra.mxu0 %v1668
    %1692 = vmatmul.f32.gmra.mxu0 %v1674
    %v1693 = vpop.f32.mrf.mxu0
    %v1694 = vadd.f32 %v1671, %v1693
    %1695 = vdwg.mxu0
    %vm1696 = vcmask 11264
    %1697 = vst.msk [vmem:[%s3] sm:$0xf] %vm1696, %v1694
    // Predicated region
    $region18: #{seq_encoder_forward.1} parent=1 // pred_check
      _
    $region19: #{seq_encoder_forward.1} parent=1 // pred_check_branch
      %1699 = sbr.rel (0) target = $region21
    $region20: #{seq_encoder_forward.1} parent=1 // pred_region
      _
    $region21: #{seq_encoder_forward.1} parent=1 // pred_fallthru
      _
    // Predicated region
    $region22: #{seq_encoder_forward.1} parent=1 // pred_check
      _
    $region23: #{seq_encoder_forward.1} parent=1 // pred_check_branch
      %1701 = sbr.rel (0) target = $region25
    $region24: #{seq_encoder_forward.1} parent=1 // pred_region
      _
    $region25: #{seq_encoder_forward.1} parent=1 // pred_fallthru
      _
    %1702 = vsyncpa [#allocation3], 1

</llo_original>
